<compile_context>
chip_gen: v7x
topology: tpu7x:2x2x1
jax: 0.10.0
libtpu: 0.0.40
codegen_flags: <defaults>
</compile_context>

<pallas_src>
import jax
import jax.numpy as jnp
from jax.experimental import pallas as pl
from jax.experimental.pallas import tpu as pltpu

EPS = 1e-5
EXPANSION = 4
MXU_DTYPE = jnp.bfloat16      # MXU operand dtype (accumulation stays f32)
ACT_DTYPE = jnp.bfloat16      # inter-pass activation storage dtype


# ----------------------------- in-kernel helpers -----------------------------
def _partial_stats(h):
    """Lane-dense per-channel [sum; sumsq] of an f32 (C, L) block -> (2, C)."""
    s1 = jnp.sum(h, axis=1, keepdims=True)           # (C, 1)
    s2 = jnp.sum(h * h, axis=1, keepdims=True)        # (C, 1)
    return jnp.concatenate([s1, s2], axis=1).T         # (2, C): C on lanes


# --------------------------------- kernels ------------------------------------
def _conv1x1_stats_kernel(x_ref, w_ref, h_ref, st_ref):
    """Pass 1: 1x1 conv (channel matmul) on the raw input + BN1 partial stats."""
    x = x_ref[...].astype(w_ref.dtype)                                # (Cin, Lt)
    h = jnp.dot(w_ref[...], x, preferred_element_type=jnp.float32)    # (C1, Lt) f32
    st_ref[...] = _partial_stats(h)        # stats from f32, before the bf16 cast
    h_ref[...] = h.astype(h_ref.dtype)     # bf16 intermediate to HBM


def _bn_relu_conv3_stats_kernel(h_ref, sc_ref, sh_ref, w_ref, o_ref, st_ref):
    """Pass 2: BN1 (folded scale/shift) + ReLU + k=3 conv + BN2 partial stats."""
    a = jnp.maximum(
        h_ref[...].astype(jnp.float32) * sc_ref[...] + sh_ref[...], 0.0)  # (C1, L)
    ab = a.astype(w_ref.dtype)                                           # bf16
    C, L = ab.shape
    zc = jnp.zeros((C, 1), ab.dtype)
    a_lft = jnp.concatenate([zc, ab[:, :L - 1]], axis=1)   # x[l-1], zero padded
    a_rgt = jnp.concatenate([ab[:, 1:], zc], axis=1)       # x[l+1], zero padded
    # Three per-tap matmuls accumulating in f32 (MRB makes this free on v7x).
    h = jnp.dot(w_ref[0], a_lft, preferred_element_type=jnp.float32)
    h = h + jnp.dot(w_ref[1], ab, preferred_element_type=jnp.float32)
    h = h + jnp.dot(w_ref[2], a_rgt, preferred_element_type=jnp.float32)
    st_ref[...] = _partial_stats(h)
    o_ref[...] = h.astype(o_ref.dtype)


def _bn_relu_conv1x1_stats_kernel(h_ref, sc_ref, sh_ref, w_ref, o_ref, st_ref):
    """Pass 3: BN2 (folded) + ReLU + 1x1 conv + BN3 partial stats."""
    a = jnp.maximum(
        h_ref[...].astype(jnp.float32) * sc_ref[...] + sh_ref[...], 0.0)
    h = jnp.dot(w_ref[...], a.astype(w_ref.dtype),
                preferred_element_type=jnp.float32)                     # (C4, Lt)
    st_ref[...] = _partial_stats(h)
    o_ref[...] = h.astype(o_ref.dtype)


def _bn_add_relu_kernel(h_ref, sc_ref, sh_ref, x_ref, o_ref):
    """Pass 4: BN3 (folded) + identity residual + final ReLU (f32 output)."""
    o_ref[...] = jnp.maximum(
        h_ref[...].astype(jnp.float32) * sc_ref[...] + sh_ref[...] + x_ref[...],
        0.0)


# ------------------------------ wrapper helpers --------------------------------
def _nbytes(shape, dtype):
    n = 1
    for d in shape:
        n *= int(d)
    return n * jnp.dtype(dtype).itemsize


def _vmem_cap_bytes():
    """Physical VMEM of the current TPU generation (64 MiB fallback, v7x-safe)."""
    try:
        cap = int(pltpu.get_tpu_info().vmem_capacity_bytes)
        if cap > 0:
            return cap
    except Exception:
        pass
    return 64 << 20


def _compiler_params(step_bytes, n_grid_axes):
    # Double-buffered per-step blocks + in-kernel temporaries, capped at 3/4 of
    # the queried per-core VMEM (48 MiB on v7x, 96 MiB on v5e/v6e).
    cap = (3 * _vmem_cap_bytes()) // 4
    limit = min(4 * step_bytes + (16 << 20), cap)
    return pltpu.CompilerParams(
        dimension_semantics=("parallel",) * n_grid_axes,
        vmem_limit_bytes=int(limit))


def _cost(flops, bytes_accessed, transcendentals=0):
    return pl.CostEstimate(flops=int(flops), transcendentals=int(transcendentals),
                           bytes_accessed=int(bytes_accessed))


def _l_tile(L, max_lanes=2048):
    """Largest multiple of 128 that divides L and is <= max_lanes, else whole L."""
    if L <= max_lanes:
        return L
    best = L
    t = 128
    while t <= max_lanes:
        if L % t == 0:
            best = t
        t += 128
    return best


def _fold_bn(stats_sum, gamma, beta, count):
    """Fold global training-mode BN stats + affine into per-channel scale/shift."""
    mean = stats_sum[0] / count
    # TODO(synk): E[x^2]-E[x]^2 can cancel catastrophically for huge N*L; use a
    #             shifted / two-pass accumulation for production sizes.
    var = jnp.maximum(stats_sum[1] / count - mean * mean, 0.0)
    scale = gamma * jax.lax.rsqrt(var + EPS)
    shift = beta - mean * scale
    return (scale[:, None].astype(jnp.float32),
            shift[:, None].astype(jnp.float32))


# ---------------------------------- forward ------------------------------------
def bottleneck_forward(x, params):
    """Bottleneck forward (training-mode BN). x: (N, C_in, L) float32, NCL."""
    N, Cin, L = x.shape
    f32 = jnp.float32

    # One-time weight prep: PyTorch (C_out, C_in, K) -> matmul layouts (bf16).
    w1 = params['w1'][:, :, 0].astype(MXU_DTYPE)                     # (C1, Cin)
    C1 = w1.shape[0]
    w2t = jnp.transpose(params['w2'], (2, 0, 1)).astype(MXU_DTYPE)   # (3, C1, C1)
    w3 = params['w3'][:, :, 0].astype(MXU_DTYPE)                     # (C4, C1)
    C4 = w3.shape[0]
    assert Cin == C4, "identity residual needs in_channels == out_channels*4"

    count = float(N * L)                 # BN statistics run over all of (N, L)

    lt = _l_tile(L)
    nlt = L // lt

    # --- BlockSpec helpers -------------------------------------------------
    def act2(c, l_tile):                 # (N, nlt) grid, batch+L tiled
        return pl.BlockSpec((None, c, l_tile), lambda n, l: (n, 0, l))

    def whole2(shape):                   # resident whole-array block
        nd = len(shape)
        return pl.BlockSpec(shape, lambda n, l: (0,) * nd)

    def stats2(c):                       # lane-dense partial stats per block
        return pl.BlockSpec((None, None, 2, c), lambda n, l: (n, l, 0, 0))

    def act1(c):                         # (N,) grid, whole L (pass 2 halo)
        return pl.BlockSpec((None, c, L), lambda n: (n, 0, 0))

    def whole1(shape):
        nd = len(shape)
        return pl.BlockSpec(shape, lambda n: (0,) * nd)

    def stats1(c):
        return pl.BlockSpec((None, 2, c), lambda n: (n, 0, 0))

    # --- pass 1: conv1 (1x1) + BN1 partial stats ----------------------------
    step1 = (_nbytes((Cin, lt), f32) + _nbytes((C1, Cin), MXU_DTYPE)
             + _nbytes((C1, lt), ACT_DTYPE) + _nbytes((2, C1), f32))
    bytes1 = (_nbytes((N, Cin, L), f32) + _nbytes((C1, Cin), MXU_DTYPE)
              + _nbytes((N, C1, L), ACT_DTYPE) + _nbytes((N, nlt, 2, C1), f32))
    h1, st1 = pl.pallas_call(
        _conv1x1_stats_kernel,
        grid=(N, nlt),
        in_specs=[act2(Cin, lt), whole2((C1, Cin))],
        out_specs=(act2(C1, lt), stats2(C1)),
        out_shape=(jax.ShapeDtypeStruct((N, C1, L), ACT_DTYPE),
                   jax.ShapeDtypeStruct((N, nlt, 2, C1), f32)),
        compiler_params=_compiler_params(step1, 2),
        cost_estimate=_cost(2 * N * L * Cin * C1 + 3 * N * C1 * L, bytes1),
    )(x, w1)
    sc1, sh1 = _fold_bn(jnp.sum(st1, axis=(0, 1)), params['g1'], params['b1'],
                        count)

    # --- pass 2: BN1 + ReLU + conv2 (k=3, per-tap matmuls) ------------------
    step2 = (_nbytes((C1, L), ACT_DTYPE) + 2 * _nbytes((C1, 1), f32)
             + _nbytes((3, C1, C1), MXU_DTYPE)
             + _nbytes((C1, L), ACT_DTYPE) + _nbytes((2, C1), f32))
    bytes2 = (2 * _nbytes((N, C1, L), ACT_DTYPE) + 2 * _nbytes((C1, 1), f32)
              + _nbytes((3, C1, C1), MXU_DTYPE) + _nbytes((N, 2, C1), f32))
    h2, st2 = pl.pallas_call(
        _bn_relu_conv3_stats_kernel,
        grid=(N,),
        in_specs=[act1(C1), whole1((C1, 1)), whole1((C1, 1)),
                  whole1((3, C1, C1))],
        out_specs=(act1(C1), stats1(C1)),
        out_shape=(jax.ShapeDtypeStruct((N, C1, L), ACT_DTYPE),
                   jax.ShapeDtypeStruct((N, 2, C1), f32)),
        compiler_params=_compiler_params(step2, 1),
        cost_estimate=_cost(6 * N * L * C1 * C1 + 8 * N * C1 * L, bytes2),
    )(h1, sc1, sh1, w2t)
    sc2, sh2 = _fold_bn(jnp.sum(st2, axis=0), params['g2'], params['b2'], count)

    # --- pass 3: BN2 + ReLU + conv3 (1x1) + BN3 partial stats ---------------
    step3 = (_nbytes((C1, lt), ACT_DTYPE) + 2 * _nbytes((C1, 1), f32)
             + _nbytes((C4, C1), MXU_DTYPE)
             + _nbytes((C4, lt), ACT_DTYPE) + _nbytes((2, C4), f32))
    bytes3 = (_nbytes((N, C1, L), ACT_DTYPE) + 2 * _nbytes((C1, 1), f32)
              + _nbytes((C4, C1), MXU_DTYPE) + _nbytes((N, C4, L), ACT_DTYPE)
              + _nbytes((N, nlt, 2, C4), f32))
    h3, st3 = pl.pallas_call(
        _bn_relu_conv1x1_stats_kernel,
        grid=(N, nlt),
        in_specs=[act2(C1, lt), whole2((C1, 1)), whole2((C1, 1)),
                  whole2((C4, C1))],
        out_specs=(act2(C4, lt), stats2(C4)),
        out_shape=(jax.ShapeDtypeStruct((N, C4, L), ACT_DTYPE),
                   jax.ShapeDtypeStruct((N, nlt, 2, C4), f32)),
        compiler_params=_compiler_params(step3, 2),
        cost_estimate=_cost(2 * N * L * C1 * C4 + 8 * N * C4 * L, bytes3),
    )(h2, sc2, sh2, w3)
    sc3, sh3 = _fold_bn(jnp.sum(st3, axis=(0, 1)), params['g3'], params['b3'],
                        count)

    # --- pass 4: BN3 + identity residual + final ReLU -----------------------
    # TODO(synk): input_output_aliases={3: 0} could reuse x's HBM buffer when x
    #             is donated; kept non-aliased here so x stays valid.
    step4 = (_nbytes((C4, lt), ACT_DTYPE) + 2 * _nbytes((C4, 1), f32)
             + 2 * _nbytes((C4, lt), f32))
    bytes4 = (_nbytes((N, C4, L), ACT_DTYPE) + 2 * _nbytes((C4, 1), f32)
              + 2 * _nbytes((N, C4, L), f32))
    out = pl.pallas_call(
        _bn_add_relu_kernel,
        grid=(N, nlt),
        in_specs=[act2(C4, lt), whole2((C4, 1)), whole2((C4, 1)),
                  act2(C4, lt)],
        out_specs=act2(C4, lt),
        out_shape=jax.ShapeDtypeStruct((N, C4, L), f32),
        compiler_params=_compiler_params(step4, 2),
        cost_estimate=_cost(4 * N * C4 * L, bytes4),
    )(h3, sc3, sh3, x)
    return out


# ----------------------------- parameter init ----------------------------------
def init_params(key, in_channels, out_channels):
    """Deterministic parameters in PyTorch-native layouts."""
    C1 = out_channels
    C4 = out_channels * EXPANSION
    ks = jax.random.split(key, 9)

    def u(k, shape, fan_in):
        bound = 1.0 / (fan_in ** 0.5)
        return jax.random.uniform(k, shape, jnp.float32, -bound, bound)

    return {
        # Conv weights (C_out, C_in, K), bias=False.
        'w1': u(ks[0], (C1, in_channels, 1), in_channels * 1),
        'w2': u(ks[1], (C1, C1, 3), C1 * 3),
        'w3': u(ks[2], (C4, C1, 1), C1 * 1),
        # BatchNorm affine parameters (C,).
        'g1': jax.random.uniform(ks[3], (C1,), jnp.float32, 0.5, 1.5),
        'b1': jax.random.uniform(ks[4], (C1,), jnp.float32, -0.5, 0.5),
        'g2': jax.random.uniform(ks[5], (C1,), jnp.float32, 0.5, 1.5),
        'b2': jax.random.uniform(ks[6], (C1,), jnp.float32, -0.5, 0.5),
        'g3': jax.random.uniform(ks[7], (C4,), jnp.float32, 0.5, 1.5),
        'b3': jax.random.uniform(ks[8], (C4,), jnp.float32, -0.5, 0.5),
    }


# ------------------------------ pure-JAX reference -----------------------------
def _q(a):
    # Mirror the kernel's bf16 MXU operands (accumulation stays f32).
    return a.astype(jnp.bfloat16).astype(jnp.float32)


def _conv1d_ref(x, w, pad):
    return jax.lax.conv_general_dilated(
        x, w, window_strides=(1,), padding=[(pad, pad)],
        dimension_numbers=('NCH', 'OIH', 'NCH'))


def _bn_ref(h, gamma, beta):
    mean = jnp.mean(h, axis=(0, 2), keepdims=True)
    var = jnp.mean((h - mean) ** 2, axis=(0, 2), keepdims=True)
    return ((h - mean) * jax.lax.rsqrt(var + EPS) * gamma.reshape(1, -1, 1)
            + beta.reshape(1, -1, 1))


def bottleneck_ref(x, p):
    h = _conv1d_ref(_q(x), _q(p['w1']), 0)
    h = jnp.maximum(_bn_ref(h, p['g1'], p['b1']), 0.0)
    h = _conv1d_ref(_q(h), _q(p['w2']), 1)
    h = jnp.maximum(_bn_ref(h, p['g2'], p['b2']), 0.0)
    h = _conv1d_ref(_q(h), _q(p['w3']), 0)
    return jnp.maximum(_bn_ref(h, p['g3'], p['b3']) + x, 0.0)


if __name__ == "__main__":
    key = jax.random.PRNGKey(0)
    k_x, k_p = jax.random.split(key)

    # Default Bottleneck config (stride=1, downsample=None): identity residual
    # requires in_channels == out_channels * expansion.
    in_channels, out_channels = 16, 4
    N, L = 2, 16

    x = jax.random.normal(k_x, (N, in_channels, L), jnp.float32)   # PyTorch NCL
    params = init_params(k_p, in_channels, out_channels)

    out = jax.block_until_ready(jax.jit(bottleneck_forward)(x, params))
    ref = jax.block_until_ready(bottleneck_ref(x, params))

    assert out.shape == (N, in_channels, L)
    assert out.dtype == jnp.float32
    # bf16 MXU operands + bf16 inter-pass activations (f32 accumulation and
    # f32 BN stats) -> tolerance sized for bf16 rounding.
    max_diff = float(jnp.max(jnp.abs(out - ref)))
    assert jnp.allclose(out, ref, rtol=3e-2, atol=3e-2), (
        "mismatch vs JAX reference: max abs diff = %g" % max_diff)
    print("KERNEL_OK")
</pallas_src>

<mosaic_0001>
module attributes {stable_mosaic.version = 11 : i64} {
  func.func @_bn_relu_conv1x1_stats_kernel(%arg0: i32, %arg1: i32, %arg2: memref<1x4x16xbf16, #tpu.memory_space<vmem>>, %arg3: memref<4x1xf32, #tpu.memory_space<vmem>>, %arg4: memref<4x1xf32, #tpu.memory_space<vmem>>, %arg5: memref<16x4xbf16, #tpu.memory_space<vmem>>, %arg6: memref<1x16x16xbf16, #tpu.memory_space<vmem>>, %arg7: memref<1x1x2x16xf32, #tpu.memory_space<vmem>>) attributes {dimension_semantics = [#tpu.dimension_semantics<parallel>, #tpu.dimension_semantics<parallel>], iteration_bounds = array<i64: 2, 1>, scalar_prefetch = 0 : i64, scratch_operands = 0 : i64, tpu.core_type = #tpu.core_type<tc>, window_params = [{transform_indices = @transform_0, window_bounds = array<i64: 1, 4, 16>}, {pipeline_mode = #tpu.pipeline_mode<synchronous>, transform_indices = @transform_1, window_bounds = array<i64: 4, 1>}, {pipeline_mode = #tpu.pipeline_mode<synchronous>, transform_indices = @transform_2, window_bounds = array<i64: 4, 1>}, {pipeline_mode = #tpu.pipeline_mode<synchronous>, transform_indices = @transform_3, window_bounds = array<i64: 16, 4>}, {transform_indices = @transform_4, window_bounds = array<i64: 1, 16, 16>}, {transform_indices = @transform_5, window_bounds = array<i64: 1, 1, 2, 16>}]} {
    %c0 = arith.constant 0 : index
    %c0_0 = arith.constant 0 : index
    %c0_1 = arith.constant 0 : index
    %0 = vector.load %arg2[%c0, %c0_0, %c0_1] : memref<1x4x16xbf16, #tpu.memory_space<vmem>>, vector<1x4x16xbf16>
    %1 = vector.shape_cast %0 : vector<1x4x16xbf16> to vector<4x16xbf16>
    %2 = arith.extf %1 : vector<4x16xbf16> to vector<4x16xf32>
    %c0_2 = arith.constant 0 : index
    %c0_3 = arith.constant 0 : index
    %3 = vector.load %arg3[%c0_2, %c0_3] : memref<4x1xf32, #tpu.memory_space<vmem>>, vector<4x1xf32>
    %4 = vector.broadcast %3 : vector<4x1xf32> to vector<4x16xf32>
    %5 = arith.mulf %2, %4 : vector<4x16xf32>
    %c0_4 = arith.constant 0 : index
    %c0_5 = arith.constant 0 : index
    %6 = vector.load %arg4[%c0_4, %c0_5] : memref<4x1xf32, #tpu.memory_space<vmem>>, vector<4x1xf32>
    %7 = vector.broadcast %6 : vector<4x1xf32> to vector<4x16xf32>
    %8 = arith.addf %5, %7 : vector<4x16xf32>
    %cst = arith.constant 0.000000e+00 : f32
    %9 = vector.broadcast %cst : f32 to vector<4x16xf32>
    %10 = arith.maximumf %8, %9 : vector<4x16xf32>
    %c0_6 = arith.constant 0 : index
    %c0_7 = arith.constant 0 : index
    %11 = vector.load %arg5[%c0_6, %c0_7] : memref<16x4xbf16, #tpu.memory_space<vmem>>, vector<16x4xbf16>
    %12 = arith.truncf %10 : vector<4x16xf32> to vector<4x16xbf16>
    %cst_8 = arith.constant dense<0.000000e+00> : vector<16x16xf32>
    %13 = tpu.matmul %11, %12, %cst_8 {dimension_numbers = #tpu.dot_dimension_numbers<[1], [0], [0], [1], [0, 0, 1, 1], [], []>} : vector<16x4xbf16>, vector<4x16xbf16>, vector<16x16xf32> -> vector<16x16xf32>
    %cst_9 = arith.constant dense<0.000000e+00> : vector<16xf32>
    %14 = vector.multi_reduction <add>, %13, %cst_9 [1] : vector<16x16xf32> to vector<16xf32>
    %15 = vector.shape_cast %14 : vector<16xf32> to vector<16x1xf32>
    %16 = arith.mulf %13, %13 : vector<16x16xf32>
    %cst_10 = arith.constant dense<0.000000e+00> : vector<16xf32>
    %17 = vector.multi_reduction <add>, %16, %cst_10 [1] : vector<16x16xf32> to vector<16xf32>
    %18 = vector.shape_cast %17 : vector<16xf32> to vector<16x1xf32>
    %19 = tpu.concatenate %15, %18 in 1 : vector<16x1xf32>, vector<16x1xf32> -> vector<16x2xf32>
    %20 = tpu.transpose %19, [1, 0] : vector<16x2xf32> -> vector<2x16xf32>
    %c0_11 = arith.constant 0 : index
    %c0_12 = arith.constant 0 : index
    %c0_13 = arith.constant 0 : index
    %c0_14 = arith.constant 0 : index
    %21 = vector.load %arg7[%c0_11, %c0_12, %c0_13, %c0_14] : memref<1x1x2x16xf32, #tpu.memory_space<vmem>>, vector<1x1x2x16xf32>
    %22 = vector.shape_cast %21 : vector<1x1x2x16xf32> to vector<2x16xf32>
    %23 = vector.shape_cast %20 : vector<2x16xf32> to vector<1x1x2x16xf32>
    tpu.vector_store %arg7[%c0_11, %c0_12, %c0_13, %c0_14], %23 {strides = array<i32>} : memref<1x1x2x16xf32, #tpu.memory_space<vmem>>, vector<1x1x2x16xf32>,
    %24 = arith.truncf %13 : vector<16x16xf32> to vector<16x16xbf16>
    %c0_15 = arith.constant 0 : index
    %c0_16 = arith.constant 0 : index
    %c0_17 = arith.constant 0 : index
    %25 = vector.load %arg6[%c0_15, %c0_16, %c0_17] : memref<1x16x16xbf16, #tpu.memory_space<vmem>>, vector<1x16x16xbf16>
    %26 = vector.shape_cast %25 : vector<1x16x16xbf16> to vector<16x16xbf16>
    %27 = vector.shape_cast %24 : vector<16x16xbf16> to vector<1x16x16xbf16>
    tpu.vector_store %arg6[%c0_15, %c0_16, %c0_17], %27 {strides = array<i32>} : memref<1x16x16xbf16, #tpu.memory_space<vmem>>, vector<1x16x16xbf16>,
    return
  }
  func.func @transform_0(%arg0: i32, %arg1: i32) -> (i32, i32, i32) {
    %c0_i32 = arith.constant 0 : i32
    %c0_i32_0 = arith.constant 0 : i32
    return %arg0, %c0_i32, %arg1 : i32, i32, i32
  }
  func.func @transform_1(%arg0: i32, %arg1: i32) -> (i32, i32) {
    %c0_i32 = arith.constant 0 : i32
    %c0_i32_0 = arith.constant 0 : i32
    %c0_i32_1 = arith.constant 0 : i32
    return %c0_i32, %c0_i32_0 : i32, i32
  }
  func.func @transform_2(%arg0: i32, %arg1: i32) -> (i32, i32) {
    %c0_i32 = arith.constant 0 : i32
    %c0_i32_0 = arith.constant 0 : i32
    %c0_i32_1 = arith.constant 0 : i32
    return %c0_i32, %c0_i32_0 : i32, i32
  }
  func.func @transform_3(%arg0: i32, %arg1: i32) -> (i32, i32) {
    %c0_i32 = arith.constant 0 : i32
    %c0_i32_0 = arith.constant 0 : i32
    %c0_i32_1 = arith.constant 0 : i32
    return %c0_i32, %c0_i32_0 : i32, i32
  }
  func.func @transform_4(%arg0: i32, %arg1: i32) -> (i32, i32, i32) {
    %c0_i32 = arith.constant 0 : i32
    %c0_i32_0 = arith.constant 0 : i32
    return %arg0, %c0_i32, %arg1 : i32, i32, i32
  }
  func.func @transform_5(%arg0: i32, %arg1: i32) -> (i32, i32, i32, i32) {
    %c0_i32 = arith.constant 0 : i32
    %c0_i32_0 = arith.constant 0 : i32
    %c0_i32_1 = arith.constant 0 : i32
    return %arg0, %arg1, %c0_i32, %c0_i32_0 : i32, i32, i32, i32
  }
}

module attributes {stable_mosaic.version = 11 : i64} {
  func.func @_conv1x1_stats_kernel(%arg0: i32, %arg1: i32, %arg2: memref<1x16x16xf32, #tpu.memory_space<vmem>>, %arg3: memref<4x16xbf16, #tpu.memory_space<vmem>>, %arg4: memref<1x4x16xbf16, #tpu.memory_space<vmem>>, %arg5: memref<1x1x2x4xf32, #tpu.memory_space<vmem>>) attributes {dimension_semantics = [#tpu.dimension_semantics<parallel>, #tpu.dimension_semantics<parallel>], iteration_bounds = array<i64: 2, 1>, scalar_prefetch = 0 : i64, scratch_operands = 0 : i64, tpu.core_type = #tpu.core_type<tc>, window_params = [{transform_indices = @transform_0, window_bounds = array<i64: 1, 16, 16>}, {pipeline_mode = #tpu.pipeline_mode<synchronous>, transform_indices = @transform_1, window_bounds = array<i64: 4, 16>}, {transform_indices = @transform_2, window_bounds = array<i64: 1, 4, 16>}, {transform_indices = @transform_3, window_bounds = array<i64: 1, 1, 2, 4>}]} {
    %c0 = arith.constant 0 : index
    %c0_0 = arith.constant 0 : index
    %c0_1 = arith.constant 0 : index
    %0 = vector.load %arg2[%c0, %c0_0, %c0_1] : memref<1x16x16xf32, #tpu.memory_space<vmem>>, vector<1x16x16xf32>
    %1 = vector.shape_cast %0 : vector<1x16x16xf32> to vector<16x16xf32>
    %2 = arith.truncf %1 : vector<16x16xf32> to vector<16x16xbf16>
    %c0_2 = arith.constant 0 : index
    %c0_3 = arith.constant 0 : index
    %3 = vector.load %arg3[%c0_2, %c0_3] : memref<4x16xbf16, #tpu.memory_space<vmem>>, vector<4x16xbf16>
    %cst = arith.constant dense<0.000000e+00> : vector<4x16xf32>
    %4 = tpu.matmul %3, %2, %cst {dimension_numbers = #tpu.dot_dimension_numbers<[1], [0], [0], [1], [0, 0, 1, 1], [], []>} : vector<4x16xbf16>, vector<16x16xbf16>, vector<4x16xf32> -> vector<4x16xf32>
    %cst_4 = arith.constant dense<0.000000e+00> : vector<4xf32>
    %5 = vector.multi_reduction <add>, %4, %cst_4 [1] : vector<4x16xf32> to vector<4xf32>
    %6 = vector.shape_cast %5 : vector<4xf32> to vector<4x1xf32>
    %7 = arith.mulf %4, %4 : vector<4x16xf32>
    %cst_5 = arith.constant dense<0.000000e+00> : vector<4xf32>
    %8 = vector.multi_reduction <add>, %7, %cst_5 [1] : vector<4x16xf32> to vector<4xf32>
    %9 = vector.shape_cast %8 : vector<4xf32> to vector<4x1xf32>
    %10 = tpu.concatenate %6, %9 in 1 : vector<4x1xf32>, vector<4x1xf32> -> vector<4x2xf32>
    %11 = tpu.transpose %10, [1, 0] : vector<4x2xf32> -> vector<2x4xf32>
    %c0_6 = arith.constant 0 : index
    %c0_7 = arith.constant 0 : index
    %c0_8 = arith.constant 0 : index
    %c0_9 = arith.constant 0 : index
    %12 = vector.load %arg5[%c0_6, %c0_7, %c0_8, %c0_9] : memref<1x1x2x4xf32, #tpu.memory_space<vmem>>, vector<1x1x2x4xf32>
    %13 = vector.shape_cast %12 : vector<1x1x2x4xf32> to vector<2x4xf32>
    %14 = vector.shape_cast %11 : vector<2x4xf32> to vector<1x1x2x4xf32>
    tpu.vector_store %arg5[%c0_6, %c0_7, %c0_8, %c0_9], %14 {strides = array<i32>} : memref<1x1x2x4xf32, #tpu.memory_space<vmem>>, vector<1x1x2x4xf32>,
    %15 = arith.truncf %4 : vector<4x16xf32> to vector<4x16xbf16>
    %c0_10 = arith.constant 0 : index
    %c0_11 = arith.constant 0 : index
    %c0_12 = arith.constant 0 : index
    %16 = vector.load %arg4[%c0_10, %c0_11, %c0_12] : memref<1x4x16xbf16, #tpu.memory_space<vmem>>, vector<1x4x16xbf16>
    %17 = vector.shape_cast %16 : vector<1x4x16xbf16> to vector<4x16xbf16>
    %18 = vector.shape_cast %15 : vector<4x16xbf16> to vector<1x4x16xbf16>
    tpu.vector_store %arg4[%c0_10, %c0_11, %c0_12], %18 {strides = array<i32>} : memref<1x4x16xbf16, #tpu.memory_space<vmem>>, vector<1x4x16xbf16>,
    return
  }
  func.func @transform_0(%arg0: i32, %arg1: i32) -> (i32, i32, i32) {
    %c0_i32 = arith.constant 0 : i32
    %c0_i32_0 = arith.constant 0 : i32
    return %arg0, %c0_i32, %arg1 : i32, i32, i32
  }
  func.func @transform_1(%arg0: i32, %arg1: i32) -> (i32, i32) {
    %c0_i32 = arith.constant 0 : i32
    %c0_i32_0 = arith.constant 0 : i32
    %c0_i32_1 = arith.constant 0 : i32
    return %c0_i32, %c0_i32_0 : i32, i32
  }
  func.func @transform_2(%arg0: i32, %arg1: i32) -> (i32, i32, i32) {
    %c0_i32 = arith.constant 0 : i32
    %c0_i32_0 = arith.constant 0 : i32
    return %arg0, %c0_i32, %arg1 : i32, i32, i32
  }
  func.func @transform_3(%arg0: i32, %arg1: i32) -> (i32, i32, i32, i32) {
    %c0_i32 = arith.constant 0 : i32
    %c0_i32_0 = arith.constant 0 : i32
    %c0_i32_1 = arith.constant 0 : i32
    return %arg0, %arg1, %c0_i32, %c0_i32_0 : i32, i32, i32, i32
  }
}

module attributes {stable_mosaic.version = 11 : i64} {
  func.func @_bn_relu_conv3_stats_kernel(%arg0: i32, %arg1: memref<1x4x16xbf16, #tpu.memory_space<vmem>>, %arg2: memref<4x1xf32, #tpu.memory_space<vmem>>, %arg3: memref<4x1xf32, #tpu.memory_space<vmem>>, %arg4: memref<3x4x4xbf16, #tpu.memory_space<vmem>>, %arg5: memref<1x4x16xbf16, #tpu.memory_space<vmem>>, %arg6: memref<1x2x4xf32, #tpu.memory_space<vmem>>) attributes {dimension_semantics = [#tpu.dimension_semantics<parallel>], iteration_bounds = array<i64: 2>, scalar_prefetch = 0 : i64, scratch_operands = 0 : i64, tpu.core_type = #tpu.core_type<tc>, window_params = [{transform_indices = @transform_0, window_bounds = array<i64: 1, 4, 16>}, {pipeline_mode = #tpu.pipeline_mode<synchronous>, transform_indices = @transform_1, window_bounds = array<i64: 4, 1>}, {pipeline_mode = #tpu.pipeline_mode<synchronous>, transform_indices = @transform_2, window_bounds = array<i64: 4, 1>}, {pipeline_mode = #tpu.pipeline_mode<synchronous>, transform_indices = @transform_3, window_bounds = array<i64: 3, 4, 4>}, {transform_indices = @transform_4, window_bounds = array<i64: 1, 4, 16>}, {transform_indices = @transform_5, window_bounds = array<i64: 1, 2, 4>}]} {
    %c0 = arith.constant 0 : index
    %c0_0 = arith.constant 0 : index
    %c0_1 = arith.constant 0 : index
    %0 = vector.load %arg1[%c0, %c0_0, %c0_1] : memref<1x4x16xbf16, #tpu.memory_space<vmem>>, vector<1x4x16xbf16>
    %1 = vector.shape_cast %0 : vector<1x4x16xbf16> to vector<4x16xbf16>
    %2 = arith.extf %1 : vector<4x16xbf16> to vector<4x16xf32>
    %c0_2 = arith.constant 0 : index
    %c0_3 = arith.constant 0 : index
    %3 = vector.load %arg2[%c0_2, %c0_3] : memref<4x1xf32, #tpu.memory_space<vmem>>, vector<4x1xf32>
    %4 = vector.broadcast %3 : vector<4x1xf32> to vector<4x16xf32>
    %5 = arith.mulf %2, %4 : vector<4x16xf32>
    %c0_4 = arith.constant 0 : index
    %c0_5 = arith.constant 0 : index
    %6 = vector.load %arg3[%c0_4, %c0_5] : memref<4x1xf32, #tpu.memory_space<vmem>>, vector<4x1xf32>
    %7 = vector.broadcast %6 : vector<4x1xf32> to vector<4x16xf32>
    %8 = arith.addf %5, %7 : vector<4x16xf32>
    %cst = arith.constant 0.000000e+00 : f32
    %9 = vector.broadcast %cst : f32 to vector<4x16xf32>
    %10 = arith.maximumf %8, %9 : vector<4x16xf32>
    %11 = arith.truncf %10 : vector<4x16xf32> to vector<4x16xbf16>
    %cst_6 = arith.constant 0.000000e+00 : bf16
    %12 = vector.broadcast %cst_6 : bf16 to vector<4x1xbf16>
    %13 = vector.extract_strided_slice %11 {offsets = [0, 0], sizes = [4, 15], strides = [1, 1]} : vector<4x16xbf16> to vector<4x15xbf16>
    %14 = tpu.concatenate %12, %13 in 1 : vector<4x1xbf16>, vector<4x15xbf16> -> vector<4x16xbf16>
    %15 = vector.extract_strided_slice %11 {offsets = [0, 1], sizes = [4, 15], strides = [1, 1]} : vector<4x16xbf16> to vector<4x15xbf16>
    %16 = tpu.concatenate %15, %12 in 1 : vector<4x15xbf16>, vector<4x1xbf16> -> vector<4x16xbf16>
    %c0_7 = arith.constant 0 : index
    %c0_8 = arith.constant 0 : index
    %c0_9 = arith.constant 0 : index
    %17 = vector.load %arg4[%c0_7, %c0_8, %c0_9] : memref<3x4x4xbf16, #tpu.memory_space<vmem>>, vector<1x4x4xbf16>
    %18 = vector.shape_cast %17 : vector<1x4x4xbf16> to vector<4x4xbf16>
    %cst_10 = arith.constant dense<0.000000e+00> : vector<4x16xf32>
    %19 = tpu.matmul %18, %14, %cst_10 {dimension_numbers = #tpu.dot_dimension_numbers<[1], [0], [0], [1], [0, 0, 1, 1], [], []>} : vector<4x4xbf16>, vector<4x16xbf16>, vector<4x16xf32> -> vector<4x16xf32>
    %c1 = arith.constant 1 : index
    %c0_11 = arith.constant 0 : index
    %c0_12 = arith.constant 0 : index
    %20 = vector.load %arg4[%c1, %c0_11, %c0_12] : memref<3x4x4xbf16, #tpu.memory_space<vmem>>, vector<1x4x4xbf16>
    %21 = vector.shape_cast %20 : vector<1x4x4xbf16> to vector<4x4xbf16>
    %cst_13 = arith.constant dense<0.000000e+00> : vector<4x16xf32>
    %22 = tpu.matmul %21, %11, %cst_13 {dimension_numbers = #tpu.dot_dimension_numbers<[1], [0], [0], [1], [0, 0, 1, 1], [], []>} : vector<4x4xbf16>, vector<4x16xbf16>, vector<4x16xf32> -> vector<4x16xf32>
    %23 = arith.addf %19, %22 : vector<4x16xf32>
    %c2 = arith.constant 2 : index
    %c0_14 = arith.constant 0 : index
    %c0_15 = arith.constant 0 : index
    %24 = vector.load %arg4[%c2, %c0_14, %c0_15] : memref<3x4x4xbf16, #tpu.memory_space<vmem>>, vector<1x4x4xbf16>
    %25 = vector.shape_cast %24 : vector<1x4x4xbf16> to vector<4x4xbf16>
    %cst_16 = arith.constant dense<0.000000e+00> : vector<4x16xf32>
    %26 = tpu.matmul %25, %16, %cst_16 {dimension_numbers = #tpu.dot_dimension_numbers<[1], [0], [0], [1], [0, 0, 1, 1], [], []>} : vector<4x4xbf16>, vector<4x16xbf16>, vector<4x16xf32> -> vector<4x16xf32>
    %27 = arith.addf %23, %26 : vector<4x16xf32>
    %cst_17 = arith.constant dense<0.000000e+00> : vector<4xf32>
    %28 = vector.multi_reduction <add>, %27, %cst_17 [1] : vector<4x16xf32> to vector<4xf32>
    %29 = vector.shape_cast %28 : vector<4xf32> to vector<4x1xf32>
    %30 = arith.mulf %27, %27 : vector<4x16xf32>
    %cst_18 = arith.constant dense<0.000000e+00> : vector<4xf32>
    %31 = vector.multi_reduction <add>, %30, %cst_18 [1] : vector<4x16xf32> to vector<4xf32>
    %32 = vector.shape_cast %31 : vector<4xf32> to vector<4x1xf32>
    %33 = tpu.concatenate %29, %32 in 1 : vector<4x1xf32>, vector<4x1xf32> -> vector<4x2xf32>
    %34 = tpu.transpose %33, [1, 0] : vector<4x2xf32> -> vector<2x4xf32>
    %c0_19 = arith.constant 0 : index
    %c0_20 = arith.constant 0 : index
    %c0_21 = arith.constant 0 : index
    %35 = vector.load %arg6[%c0_19, %c0_20, %c0_21] : memref<1x2x4xf32, #tpu.memory_space<vmem>>, vector<1x2x4xf32>
    %36 = vector.shape_cast %35 : vector<1x2x4xf32> to vector<2x4xf32>
    %37 = vector.shape_cast %34 : vector<2x4xf32> to vector<1x2x4xf32>
    tpu.vector_store %arg6[%c0_19, %c0_20, %c0_21], %37 {strides = array<i32>} : memref<1x2x4xf32, #tpu.memory_space<vmem>>, vector<1x2x4xf32>,
    %38 = arith.truncf %27 : vector<4x16xf32> to vector<4x16xbf16>
    %c0_22 = arith.constant 0 : index
    %c0_23 = arith.constant 0 : index
    %c0_24 = arith.constant 0 : index
    %39 = vector.load %arg5[%c0_22, %c0_23, %c0_24] : memref<1x4x16xbf16, #tpu.memory_space<vmem>>, vector<1x4x16xbf16>
    %40 = vector.shape_cast %39 : vector<1x4x16xbf16> to vector<4x16xbf16>
    %41 = vector.shape_cast %38 : vector<4x16xbf16> to vector<1x4x16xbf16>
    tpu.vector_store %arg5[%c0_22, %c0_23, %c0_24], %41 {strides = array<i32>} : memref<1x4x16xbf16, #tpu.memory_space<vmem>>, vector<1x4x16xbf16>,
    return
  }
  func.func @transform_0(%arg0: i32) -> (i32, i32, i32) {
    %c0_i32 = arith.constant 0 : i32
    %c0_i32_0 = arith.constant 0 : i32
    %c0_i32_1 = arith.constant 0 : i32
    return %arg0, %c0_i32, %c0_i32_0 : i32, i32, i32
  }
  func.func @transform_1(%arg0: i32) -> (i32, i32) {
    %c0_i32 = arith.constant 0 : i32
    %c0_i32_0 = arith.constant 0 : i32
    %c0_i32_1 = arith.constant 0 : i32
    return %c0_i32, %c0_i32_0 : i32, i32
  }
  func.func @transform_2(%arg0: i32) -> (i32, i32) {
    %c0_i32 = arith.constant 0 : i32
    %c0_i32_0 = arith.constant 0 : i32
    %c0_i32_1 = arith.constant 0 : i32
    return %c0_i32, %c0_i32_0 : i32, i32
  }
  func.func @transform_3(%arg0: i32) -> (i32, i32, i32) {
    %c0_i32 = arith.constant 0 : i32
    %c0_i32_0 = arith.constant 0 : i32
    %c0_i32_1 = arith.constant 0 : i32
    %c0_i32_2 = arith.constant 0 : i32
    return %c0_i32, %c0_i32_0, %c0_i32_1 : i32, i32, i32
  }
  func.func @transform_4(%arg0: i32) -> (i32, i32, i32) {
    %c0_i32 = arith.constant 0 : i32
    %c0_i32_0 = arith.constant 0 : i32
    %c0_i32_1 = arith.constant 0 : i32
    return %arg0, %c0_i32, %c0_i32_0 : i32, i32, i32
  }
  func.func @transform_5(%arg0: i32) -> (i32, i32, i32) {
    %c0_i32 = arith.constant 0 : i32
    %c0_i32_0 = arith.constant 0 : i32
    %c0_i32_1 = arith.constant 0 : i32
    return %arg0, %c0_i32, %c0_i32_0 : i32, i32, i32
  }
}

module attributes {stable_mosaic.version = 11 : i64} {
  func.func @_bn_add_relu_kernel(%arg0: i32, %arg1: i32, %arg2: memref<1x16x16xbf16, #tpu.memory_space<vmem>>, %arg3: memref<16x1xf32, #tpu.memory_space<vmem>>, %arg4: memref<16x1xf32, #tpu.memory_space<vmem>>, %arg5: memref<1x16x16xf32, #tpu.memory_space<vmem>>, %arg6: memref<1x16x16xf32, #tpu.memory_space<vmem>>) attributes {dimension_semantics = [#tpu.dimension_semantics<parallel>, #tpu.dimension_semantics<parallel>], iteration_bounds = array<i64: 2, 1>, scalar_prefetch = 0 : i64, scratch_operands = 0 : i64, tpu.core_type = #tpu.core_type<tc>, window_params = [{transform_indices = @transform_0, window_bounds = array<i64: 1, 16, 16>}, {pipeline_mode = #tpu.pipeline_mode<synchronous>, transform_indices = @transform_1, window_bounds = array<i64: 16, 1>}, {pipeline_mode = #tpu.pipeline_mode<synchronous>, transform_indices = @transform_2, window_bounds = array<i64: 16, 1>}, {transform_indices = @transform_3, window_bounds = array<i64: 1, 16, 16>}, {transform_indices = @transform_4, window_bounds = array<i64: 1, 16, 16>}]} {
    %c0 = arith.constant 0 : index
    %c0_0 = arith.constant 0 : index
    %c0_1 = arith.constant 0 : index
    %0 = vector.load %arg2[%c0, %c0_0, %c0_1] : memref<1x16x16xbf16, #tpu.memory_space<vmem>>, vector<1x16x16xbf16>
    %1 = vector.shape_cast %0 : vector<1x16x16xbf16> to vector<16x16xbf16>
    %2 = arith.extf %1 : vector<16x16xbf16> to vector<16x16xf32>
    %c0_2 = arith.constant 0 : index
    %c0_3 = arith.constant 0 : index
    %3 = vector.load %arg3[%c0_2, %c0_3] : memref<16x1xf32, #tpu.memory_space<vmem>>, vector<16x1xf32>
    %4 = vector.broadcast %3 : vector<16x1xf32> to vector<16x16xf32>
    %5 = arith.mulf %2, %4 : vector<16x16xf32>
    %c0_4 = arith.constant 0 : index
    %c0_5 = arith.constant 0 : index
    %6 = vector.load %arg4[%c0_4, %c0_5] : memref<16x1xf32, #tpu.memory_space<vmem>>, vector<16x1xf32>
    %7 = vector.broadcast %6 : vector<16x1xf32> to vector<16x16xf32>
    %8 = arith.addf %5, %7 : vector<16x16xf32>
    %c0_6 = arith.constant 0 : index
    %c0_7 = arith.constant 0 : index
    %c0_8 = arith.constant 0 : index
    %9 = vector.load %arg5[%c0_6, %c0_7, %c0_8] : memref<1x16x16xf32, #tpu.memory_space<vmem>>, vector<1x16x16xf32>
    %10 = vector.shape_cast %9 : vector<1x16x16xf32> to vector<16x16xf32>
    %11 = arith.addf %8, %10 : vector<16x16xf32>
    %cst = arith.constant 0.000000e+00 : f32
    %12 = vector.broadcast %cst : f32 to vector<16x16xf32>
    %13 = arith.maximumf %11, %12 : vector<16x16xf32>
    %c0_9 = arith.constant 0 : index
    %c0_10 = arith.constant 0 : index
    %c0_11 = arith.constant 0 : index
    %14 = vector.load %arg6[%c0_9, %c0_10, %c0_11] : memref<1x16x16xf32, #tpu.memory_space<vmem>>, vector<1x16x16xf32>
    %15 = vector.shape_cast %14 : vector<1x16x16xf32> to vector<16x16xf32>
    %16 = vector.shape_cast %13 : vector<16x16xf32> to vector<1x16x16xf32>
    tpu.vector_store %arg6[%c0_9, %c0_10, %c0_11], %16 {strides = array<i32>} : memref<1x16x16xf32, #tpu.memory_space<vmem>>, vector<1x16x16xf32>,
    return
  }
  func.func @transform_0(%arg0: i32, %arg1: i32) -> (i32, i32, i32) {
    %c0_i32 = arith.constant 0 : i32
    %c0_i32_0 = arith.constant 0 : i32
    return %arg0, %c0_i32, %arg1 : i32, i32, i32
  }
  func.func @transform_1(%arg0: i32, %arg1: i32) -> (i32, i32) {
    %c0_i32 = arith.constant 0 : i32
    %c0_i32_0 = arith.constant 0 : i32
    %c0_i32_1 = arith.constant 0 : i32
    return %c0_i32, %c0_i32_0 : i32, i32
  }
  func.func @transform_2(%arg0: i32, %arg1: i32) -> (i32, i32) {
    %c0_i32 = arith.constant 0 : i32
    %c0_i32_0 = arith.constant 0 : i32
    %c0_i32_1 = arith.constant 0 : i32
    return %c0_i32, %c0_i32_0 : i32, i32
  }
  func.func @transform_3(%arg0: i32, %arg1: i32) -> (i32, i32, i32) {
    %c0_i32 = arith.constant 0 : i32
    %c0_i32_0 = arith.constant 0 : i32
    return %arg0, %c0_i32, %arg1 : i32, i32, i32
  }
  func.func @transform_4(%arg0: i32, %arg1: i32) -> (i32, i32, i32) {
    %c0_i32 = arith.constant 0 : i32
    %c0_i32_0 = arith.constant 0 : i32
    return %arg0, %c0_i32, %arg1 : i32, i32, i32
  }
}

</mosaic_0001>

<llo_original>
// kernel: bottleneck_forward.4
$region0: #{bottleneck_forward.4}
  #allocation0 [shape = 'u32[]', space=smem, size = 0x4, offset = 0x4, fixed_abs, tag = 'smem constant byte address 0x4 - core index']
  #allocation1 [shape = 'u32[144,128]{1,0:T(1,128)}', space=vmem, size = 0x12000, scoped, tag = 'internal scratch']
  %s0 = inlined_call_operand.vmem [shape: f32[2,16,16], index: 0, kind: input, shape index: {}]
  %s1 = inlined_call_operand.vmem [shape: bf16[4,16], index: 1, kind: input, shape index: {}]
  %s2 = inlined_call_operand.vmem [shape: bf16[2,4,16], index: 2, kind: output, shape index: {0}]
  %s3 = inlined_call_operand.vmem [shape: f32[2,1,2,4], index: 3, kind: output, shape index: {1}]
  %4 = xla_tuple %s2, %s3
  %s5 = sld [smem:[#allocation0]]
  $region49: #{bottleneck_forward.4} parent=0
    _
  %s7 = ssub.s32 1, %s5
  %s8 = scalar_select 0, %s7, %s5
  loop: start=0, step=1, limit=4
  $region2: #{bottleneck_forward.4} parent=0 // loop_pre_header
    _
  $region3: #{bottleneck_forward.4} parent=0 // loop_header
    %s10 = sphi 0, %s14
    %p11 = scmp.ge.s32.totalorder %s10, 4
    %s17 = sphi 0, %s29
    %s18 = sphi 0, %s25
    %s19 = sphi 0, %s17
    %s20 = sphi 0, %s18
    %s21 = sphi 0, %s19
    %s22 = sphi 0, %s20
    %s34 = sphi 0, %s36
    %s37 = sphi 0, %s34
    %s38 = sphi 0, %s37
    %s54 = sphi 0, %s38
    %s58 = sphi 0, %s58
    %s60 = sphi 0, %s58
    %s61 = sphi 0, %s60
    %s75 = sphi 0, %s61
    %s83 = sphi 0, %s85
    %s86 = sphi 0, %s83
    %s87 = sphi 0, %s86
    %s103 = sphi 0, %s87
    %s111 = sphi 0, %s113
    %s114 = sphi 0, %s111
    %s115 = sphi 0, %s114
    %s131 = sphi 0, %s115
  $region4: #{bottleneck_forward.4} parent=0 // loop_header_branch
    %13 = sbr.rel (%p11) target = $region8
  $region5: #{bottleneck_forward.4} parent=0 // loop_body
    %s15 = ssub.s32 %s10, 1
    %s16 = ssub.s32 %s10, 2
    %s23 = sadd.s32 1, %s18
    %p24 = scmp.ge.s32.totalorder %s23, 1
    %s25 = scalar_select %p24, 0, %s23
    %s26 = sadd.s32 1, %s17
    %s27 = scalar_select %p24, %s26, %s17
    %p28 = scmp.ge.s32.totalorder %s27, 2
    %s29 = scalar_select %p28, 0, %s27
    %s30 = ssub.s32 %s17, %s29
    %s31 = ssub.s32 %s18, %s25
    %s32 = sor.u32 %s30, %s31
    %p33 = scmp.eq.s32.totalorder %s32, 0
    %s35 = sadd.s32 %s34, 1
    %s36 = scalar_select %p33, %s34, %s35
    %p39 = pneg %p33
    %p40 = scmp.eq.s32.totalorder %s10, 1
    %p41 = por %p39, %p40
    %p42 = scmp.ne.s32.totalorder %s34, %s37
    %p43 = scmp.eq.s32.totalorder %s10, 0
    %p44 = por %p42, %p43
    %p45 = scmp.ne.s32.totalorder %s34, %s37
    %p46 = scmp.eq.s32.totalorder %s15, 1
    %p47 = por %p45, %p46
    %p48 = scmp.ne.s32.totalorder %s37, %s38
    %p49 = scmp.eq.s32.totalorder %s15, 0
    %p50 = por %p48, %p49
    %p51 = scmp.ne.s32.totalorder %s37, %s38
    %p52 = scmp.eq.s32.totalorder %s16, 1
    %p53 = por %p51, %p52
    %p55 = scmp.ne.s32.totalorder %s38, %s54
    %p56 = scmp.eq.s32.totalorder %s16, 0
    %p57 = por %p55, %p56
    %s59 = sadd.s32 %s58, 1
    %p62 = scmp.eq.s32.totalorder %s10, 1
    %p63 = scmp.ne.s32.totalorder %s58, %s60
    %p64 = scmp.eq.s32.totalorder %s10, 0
    %p65 = por %p63, %p64
    %p66 = scmp.ne.s32.totalorder %s58, %s60
    %p67 = scmp.eq.s32.totalorder %s15, 1
    %p68 = por %p66, %p67
    %p69 = scmp.ne.s32.totalorder %s60, %s61
    %p70 = scmp.eq.s32.totalorder %s15, 0
    %p71 = por %p69, %p70
    %p72 = scmp.ne.s32.totalorder %s60, %s61
    %p73 = scmp.eq.s32.totalorder %s16, 1
    %p74 = por %p72, %p73
    %p76 = scmp.ne.s32.totalorder %s61, %s75
    %p77 = scmp.eq.s32.totalorder %s16, 0
    %p78 = por %p76, %p77
    %s79 = ssub.s32 %s17, %s29
    %s80 = ssub.s32 %s18, %s25
    %s81 = sor.u32 %s79, %s80
    %p82 = scmp.eq.s32.totalorder %s81, 0
    %s84 = sadd.s32 %s83, 1
    %s85 = scalar_select %p82, %s83, %s84
    %p88 = pneg %p82
    %p89 = scmp.eq.s32.totalorder %s10, 1
    %p90 = por %p88, %p89
    %p91 = scmp.ne.s32.totalorder %s83, %s86
    %p92 = scmp.eq.s32.totalorder %s10, 0
    %p93 = por %p91, %p92
    %p94 = scmp.ne.s32.totalorder %s83, %s86
    %p95 = scmp.eq.s32.totalorder %s15, 1
    %p96 = por %p94, %p95
    %p97 = scmp.ne.s32.totalorder %s86, %s87
    %p98 = scmp.eq.s32.totalorder %s15, 0
    %p99 = por %p97, %p98
    %p100 = scmp.ne.s32.totalorder %s86, %s87
    %p101 = scmp.eq.s32.totalorder %s16, 1
    %p102 = por %p100, %p101
    %p104 = scmp.ne.s32.totalorder %s87, %s103
    %p105 = scmp.eq.s32.totalorder %s16, 0
    %p106 = por %p104, %p105
    %s107 = ssub.s32 %s17, %s29
    %s108 = ssub.s32 %s18, %s25
    %s109 = sor.u32 %s107, %s108
    %p110 = scmp.eq.s32.totalorder %s109, 0
    %s112 = sadd.s32 %s111, 1
    %s113 = scalar_select %p110, %s111, %s112
    %p116 = pneg %p110
    %p117 = scmp.eq.s32.totalorder %s10, 1
    %p118 = por %p116, %p117
    %p119 = scmp.ne.s32.totalorder %s111, %s114
    %p120 = scmp.eq.s32.totalorder %s10, 0
    %p121 = por %p119, %p120
    %p122 = scmp.ne.s32.totalorder %s111, %s114
    %p123 = scmp.eq.s32.totalorder %s15, 1
    %p124 = por %p122, %p123
    %p125 = scmp.ne.s32.totalorder %s114, %s115
    %p126 = scmp.eq.s32.totalorder %s15, 0
    %p127 = por %p125, %p126
    %p128 = scmp.ne.s32.totalorder %s114, %s115
    %p129 = scmp.eq.s32.totalorder %s16, 1
    %p130 = por %p128, %p129
    %p132 = scmp.ne.s32.totalorder %s115, %s131
    %p133 = scmp.eq.s32.totalorder %s16, 0
    %p134 = por %p132, %p133
    %p135 = scmp.le.s32.totalorder 1, %s10
    %p136 = scmp.lt.s32.totalorder %s10, 3
    %p137 = pnand %p135, %p136
    %p138 = pneg %p137
    // Predicated region
    $region9: #{bottleneck_forward.4} parent=5 // pred_check
      _
    $region10: #{bottleneck_forward.4} parent=5 // pred_check_branch
      %140 = sbr.rel (%p137) target = $region12
    $region11: #{bottleneck_forward.4} parent=5 // pred_region
      %s141 = ssub.s32 %s10, 1
      // Predicated region
      $region13: #{bottleneck_forward.4} parent=11 // pred_check
        %p142 = pneg %p71
      $region14: #{bottleneck_forward.4} parent=11 // pred_check_branch
        %144 = sbr.rel (%p142) target = $region16
      $region15: #{bottleneck_forward.4} parent=11 // pred_region
        _
      $region16: #{bottleneck_forward.4} parent=11 // pred_fallthru
        _
    $region12: #{bottleneck_forward.4} parent=5 // pred_fallthru
      _
    %p145 = scmp.lt.s32.totalorder %s10, 2
    // Predicated region
    $region17: #{bottleneck_forward.4} parent=5 // pred_check
      %p146 = pneg %p145
    $region18: #{bottleneck_forward.4} parent=5 // pred_check_branch
      %148 = sbr.rel (%p146) target = $region20
    $region19: #{bottleneck_forward.4} parent=5 // pred_region
      // Predicated region
      $region21: #{bottleneck_forward.4} parent=19 // pred_check
        %p149 = pneg %p44
      $region22: #{bottleneck_forward.4} parent=19 // pred_check_branch
        %151 = sbr.rel (%p149) target = $region24
      $region23: #{bottleneck_forward.4} parent=19 // pred_region
        %p152 = scmp.lt.s32.totalorder %s17, 1
        %s153 = scalar_select %p152, %s17, 1
        %p154 = scmp.lt.s32.totalorder %s18, 0
        %s155 = scalar_select %p154, %s18, 0
        %s156 = smul.addr %s153, 2
        %s157 = sadd.s32 %s155, %s156
        %s158 = smul.addr %s157, 8
        %s159 = scalar_lea.vmem %s0, %s158
      $region24: #{bottleneck_forward.4} parent=19 // pred_fallthru
        _
    $region20: #{bottleneck_forward.4} parent=5 // pred_fallthru
      _
    %p160 = scmp.le.s32.totalorder 1, %s10
    %p161 = scmp.lt.s32.totalorder %s10, 3
    %p162 = pnand %p160, %p161
    %p163 = pneg %p162
    // Predicated region
    $region25: #{bottleneck_forward.4} parent=5 // pred_check
      _
    $region26: #{bottleneck_forward.4} parent=5 // pred_check_branch
      %165 = sbr.rel (%p162) target = $region28
    $region27: #{bottleneck_forward.4} parent=5 // pred_region
      %s166 = ssub.s32 %s10, 1
      %p167 = scmp.lt.s32.totalorder %s19, 1
      %s168 = scalar_select %p167, %s19, 1
      %p169 = scmp.lt.s32.totalorder %s20, 0
      %s170 = scalar_select %p169, %s20, 0
      %s171 = smul.addr %s168, 2
      %s172 = sadd.s32 %s170, %s171
      %s173 = smul.addr %s172, 8
      %s174 = scalar_lea.vmem %s0, %s173
      %p175 = pneg %p50
      %p176 = pneg %p47
      %p177 = pneg %p71
      %p178 = pneg %p68
      %p179 = pneg %p99
      %p180 = pneg %p96
      %p181 = scmp.lt.s32.totalorder %s19, 1
      %s182 = scalar_select %p181, %s19, 1
      %p183 = scmp.lt.s32.totalorder %s20, 0
      %s184 = scalar_select %p183, %s20, 0
      %s185 = sadd.s32 %s184, %s182
      %s186 = smul.addr %s185, 2
      %s187 = scalar_lea.vmem %s2, %s186
      %p188 = pneg %p127
      %p189 = pneg %p124
      %p190 = scmp.lt.s32.totalorder %s19, 1
      %s191 = scalar_select %p190, %s19, 1
      %p192 = scmp.lt.s32.totalorder %s20, 0
      %s193 = scalar_select %p192, %s20, 0
      %s194 = sadd.s32 %s193, %s191
      %s195 = smul.addr %s194, 2
      %s196 = scalar_lea.vmem %s3, %s195
      %p197 = scmp.lt.s32.totalorder %s19, 1
      %s198 = scalar_select %p197, %s19, 1
      %p199 = scmp.lt.s32.totalorder %s20, 0
      %s200 = scalar_select %p199, %s20, 0
      %s201 = smul.addr %s198, 2
      %s202 = sadd.s32 %s200, %s201
      %s203 = smul.addr %s202, 8
      %s204 = scalar_lea.vmem %s0, %s203
      %p205 = scmp.lt.s32.totalorder %s19, 1
      %s206 = scalar_select %p205, %s19, 1
      %p207 = scmp.lt.s32.totalorder %s20, 0
      %s208 = scalar_select %p207, %s20, 0
      %s209 = sadd.s32 %s208, %s206
      %s210 = smul.addr %s209, 2
      %s211 = scalar_lea.vmem %s2, %s210
      %p212 = scmp.lt.s32.totalorder %s19, 1
      %s213 = scalar_select %p212, %s19, 1
      %p214 = scmp.lt.s32.totalorder %s20, 0
      %s215 = scalar_select %p214, %s20, 0
      %s216 = sadd.s32 %s215, %s213
      %s217 = smul.addr %s216, 2
      %s218 = scalar_lea.vmem %s3, %s217
      %v220 = vld [vmem:[%s204] sm:$0xff]
      %v221 = vld [vmem:[%s204 + $0x8] sm:$0xff]
      %v222 = vpack.c.bf16 %v221, %v220
      %v223 = vld [vmem:[%s1] sm:$0x3]
      %vm224 = vcmask 130048
      %v226 = vsel %vm224, %v223, 0
      %228 = vmatprep.subr.bf16.mxu0 0
      %229 = vmatpush1.bf16.msra.mxu0 %v222
      %230 = vmatprep.subr.bf16.mxu0 0
      %231 = vmatpush1.bf16.msra.mxu0 0
      %232 = vmatprep.subr.bf16.mxu0 0
      %233 = vmatpush1.bf16.msra.mxu0 0
      %234 = vmatprep.subr.bf16.mxu0 0
      %235 = vmatpush1.bf16.msra.mxu0 0
      %236 = vmatprep.subr.bf16.mxu0 0
      %237 = vmatpush1.bf16.msra.mxu0 0
      %238 = vmatprep.subr.bf16.mxu0 0
      %239 = vmatpush1.bf16.msra.mxu0 0
      %240 = vmatprep.subr.bf16.mxu0 0
      %241 = vmatpush1.bf16.msra.mxu0 0
      %242 = vmatprep.subr.bf16.mxu0 0
      %243 = vmatpush1.bf16.msra.mxu0 0
      %244 = vmatprep.subr.bf16.mxu0 0
      %245 = vmatpush1.bf16.msra.mxu0 0
      %246 = vmatprep.subr.bf16.mxu0 0
      %247 = vmatpush1.bf16.msra.mxu0 0
      %248 = vmatprep.subr.bf16.mxu0 0
      %249 = vmatpush1.bf16.msra.mxu0 0
      %250 = vmatprep.subr.bf16.mxu0 0
      %251 = vmatpush1.bf16.msra.mxu0 0
      %252 = vmatprep.subr.bf16.mxu0 0
      %253 = vmatpush1.bf16.msra.mxu0 0
      %254 = vmatprep.subr.bf16.mxu0 0
      %255 = vmatpush1.bf16.msra.mxu0 0
      %256 = vmatprep.subr.bf16.mxu0 0
      %257 = vmatpush1.bf16.msra.mxu0 0
      %258 = vmatprep.subr.bf16.mxu0 0
      %259 = vmatpush1.bf16.msra.mxu0 0
      %260 = vmatprep.mubr.bf16.mxu0 0
      %261 = vmatmul.mubr.bf16.gmra.mrb[0].mxu0 %v226
      %v262 = vpop.f32.mrb[0].mxu0
      %v263 = vadd.f32 0.0, %v262
      %v264 = vpop.f32.mrb[0].mxu0
      %v265 = vpop.f32.mrb[0].mxu0
      %v266 = vpop.f32.mrb[0].mxu0
      %267 = vdwg.mxu0
      %vm268 = vcmask 125952
      %v269 = vsel %vm268, %v263, 0.0
      %270 = vadd.xlane.f32.xlu0 %v269
      %v271 = vpop.xlane.xlu0 %270
      %v272 = vmul.f32 %v263, %v263
      %v273 = vsel %vm268, %v272, 0.0
      %274 = vadd.xlane.f32.xlu0 %v273
      %v275 = vpop.xlane.xlu0 %274
      %vm276 = vcmask 7168
      %v277 = vsel %vm276, %v271, %v275
      %278 = vxpose.xlu0.b32.start [1/16] %v277, 128
      %279 = vxpose.xlu0.b32.cont [2/16] 0.0, 128
      %280 = vxpose.xlu0.b32.cont [3/16] 0.0, 128
      %281 = vxpose.xlu0.b32.cont [4/16] 0.0, 128
      %282 = vxpose.xlu0.b32.cont [5/16] 0.0, 128
      %283 = vxpose.xlu0.b32.cont [6/16] 0.0, 128
      %284 = vxpose.xlu0.b32.cont [7/16] 0.0, 128
      %285 = vxpose.xlu0.b32.cont [8/16] 0.0, 128
      %286 = vxpose.xlu0.b32.cont [9/16] 0.0, 128
      %287 = vxpose.xlu0.b32.cont [10/16] 0.0, 128
      %288 = vxpose.xlu0.b32.cont [11/16] 0.0, 128
      %289 = vxpose.xlu0.b32.cont [12/16] 0.0, 128
      %290 = vxpose.xlu0.b32.cont [13/16] 0.0, 128
      %291 = vxpose.xlu0.b32.cont [14/16] 0.0, 128
      %292 = vxpose.xlu0.b32.cont [15/16] 0.0, 128
      %293 = vxpose.xlu0.b32.end [16/16] 0.0, 128
      %v294 = vpop.trf.xlu0
      %v295 = vpop.trf.xlu0
      %v296 = vpop.trf.xlu0
      %v297 = vpop.trf.xlu0
      %v298 = vpop.trf.xlu0
      %v299 = vpop.trf.xlu0
      %v300 = vpop.trf.xlu0
      %v301 = vpop.trf.xlu0
      %v302 = vpop.trf.xlu0
      %v303 = vpop.trf.xlu0
      %v304 = vpop.trf.xlu0
      %v305 = vpop.trf.xlu0
      %v306 = vpop.trf.xlu0
      %v307 = vpop.trf.xlu0
      %v308 = vpop.trf.xlu0
      %v309 = vpop.trf.xlu0
      %vm310 = vcmask 25600
      %311 = vst.msk [vmem:[%s218] sm:$0x3] %vm310, %v294
      %v312 = vpack.c.bf16 %v263, %v263
      %vm313 = vcmask 123904
      %314 = vst.msk [vmem:[%s211] sm:$0x3] %vm313, %v312
      %p315 = scmp.lt.s32.totalorder %s19, 1
      %s316 = scalar_select %p315, %s19, 1
      %p317 = scmp.lt.s32.totalorder %s20, 0
      %s318 = scalar_select %p317, %s20, 0
      %s319 = sadd.s32 %s318, %s316
      %s320 = smul.addr %s319, 2
      %s321 = scalar_lea.vmem %s2, %s320
      %p322 = scmp.lt.s32.totalorder %s19, 1
      %s323 = scalar_select %p322, %s19, 1
      %p324 = scmp.lt.s32.totalorder %s20, 0
      %s325 = scalar_select %p324, %s20, 0
      %s326 = sadd.s32 %s325, %s323
      %s327 = smul.addr %s326, 2
      %s328 = scalar_lea.vmem %s3, %s327
      // Predicated region
      $region29: #{bottleneck_forward.4} parent=27 // pred_check
        %p329 = pneg %p96
      $region30: #{bottleneck_forward.4} parent=27 // pred_check_branch
        %331 = sbr.rel (%p329) target = $region32
      $region31: #{bottleneck_forward.4} parent=27 // pred_region
        _
      $region32: #{bottleneck_forward.4} parent=27 // pred_fallthru
        _
      // Predicated region
      $region33: #{bottleneck_forward.4} parent=27 // pred_check
        %p332 = pneg %p124
      $region34: #{bottleneck_forward.4} parent=27 // pred_check_branch
        %334 = sbr.rel (%p332) target = $region36
      $region35: #{bottleneck_forward.4} parent=27 // pred_region
        _
      $region36: #{bottleneck_forward.4} parent=27 // pred_fallthru
        _
    $region28: #{bottleneck_forward.4} parent=5 // pred_fallthru
      _
    %p335 = scmp.le.s32.totalorder 2, %s10
    // Predicated region
    $region37: #{bottleneck_forward.4} parent=5 // pred_check
      %p336 = pneg %p335
    $region38: #{bottleneck_forward.4} parent=5 // pred_check_branch
      %338 = sbr.rel (%p336) target = $region40
    $region39: #{bottleneck_forward.4} parent=5 // pred_region
      %s339 = ssub.s32 %s10, 2
      // Predicated region
      $region41: #{bottleneck_forward.4} parent=39 // pred_check
        %p340 = pneg %p102
      $region42: #{bottleneck_forward.4} parent=39 // pred_check_branch
        %342 = sbr.rel (%p340) target = $region44
      $region43: #{bottleneck_forward.4} parent=39 // pred_region
        %p343 = scmp.lt.s32.totalorder %s21, 1
        %s344 = scalar_select %p343, %s21, 1
        %p345 = scmp.lt.s32.totalorder %s22, 0
        %s346 = scalar_select %p345, %s22, 0
        %s347 = sadd.s32 %s346, %s344
        %s348 = smul.addr %s347, 2
        %s349 = scalar_lea.vmem %s2, %s348
      $region44: #{bottleneck_forward.4} parent=39 // pred_fallthru
        _
      // Predicated region
      $region45: #{bottleneck_forward.4} parent=39 // pred_check
        %p350 = pneg %p130
      $region46: #{bottleneck_forward.4} parent=39 // pred_check_branch
        %352 = sbr.rel (%p350) target = $region48
      $region47: #{bottleneck_forward.4} parent=39 // pred_region
        %p353 = scmp.lt.s32.totalorder %s21, 1
        %s354 = scalar_select %p353, %s21, 1
        %p355 = scmp.lt.s32.totalorder %s22, 0
        %s356 = scalar_select %p355, %s22, 0
        %s357 = sadd.s32 %s356, %s354
        %s358 = smul.addr %s357, 2
        %s359 = scalar_lea.vmem %s3, %s358
      $region48: #{bottleneck_forward.4} parent=39 // pred_fallthru
        _
    $region40: #{bottleneck_forward.4} parent=5 // pred_fallthru
      _
  $region6: #{bottleneck_forward.4} parent=0 // loop_footer
    %s14 = sadd.s32 1, %s10
  $region7: #{bottleneck_forward.4} parent=0 // loop_footer_branch
    %9 = sbr.rel target = $region3
  $region8: #{bottleneck_forward.4} parent=0 // loop_exit
    _

// kernel: bottleneck_forward.6
$region0: #{bottleneck_forward.6}
  #allocation0 [shape = 'u32[]', space=smem, size = 0x4, offset = 0x4, fixed_abs, tag = 'smem constant byte address 0x4 - core index']
  #allocation1 [shape = 'u32[144,128]{1,0:T(1,128)}', space=vmem, size = 0x12000, scoped, tag = 'internal scratch']
  %s0 = inlined_call_operand.vmem [shape: bf16[2,4,16], index: 0, kind: input, shape index: {}]
  %s1 = inlined_call_operand.vmem [shape: f32[4,1], index: 1, kind: input, shape index: {}]
  %s2 = inlined_call_operand.vmem [shape: f32[4,1], index: 2, kind: input, shape index: {}]
  %s3 = inlined_call_operand.vmem [shape: bf16[16,4], index: 3, kind: input, shape index: {}]
  %s4 = inlined_call_operand.vmem [shape: bf16[2,16,16], index: 4, kind: output, shape index: {0}]
  %s5 = inlined_call_operand.vmem [shape: f32[2,1,2,16], index: 5, kind: output, shape index: {1}]
  %6 = xla_tuple %s4, %s5
  %s7 = sld [smem:[#allocation0]]
  $region57: #{bottleneck_forward.6} parent=0
    _
  %s9 = ssub.s32 1, %s7
  %s10 = scalar_select 0, %s9, %s7
  loop: start=0, step=1, limit=4
  $region2: #{bottleneck_forward.6} parent=0 // loop_pre_header
    _
  $region3: #{bottleneck_forward.6} parent=0 // loop_header
    %s12 = sphi 0, %s16
    %p13 = scmp.ge.s32.totalorder %s12, 4
    %s19 = sphi 0, %s31
    %s20 = sphi 0, %s27
    %s21 = sphi 0, %s19
    %s22 = sphi 0, %s20
    %s23 = sphi 0, %s21
    %s24 = sphi 0, %s22
    %s36 = sphi 0, %s38
    %s39 = sphi 0, %s36
    %s40 = sphi 0, %s39
    %s56 = sphi 0, %s40
    %s60 = sphi 0, %s60
    %s62 = sphi 0, %s60
    %s63 = sphi 0, %s62
    %s77 = sphi 0, %s63
    %s81 = sphi 0, %s81
    %s83 = sphi 0, %s81
    %s84 = sphi 0, %s83
    %s98 = sphi 0, %s84
    %s102 = sphi 0, %s102
    %s104 = sphi 0, %s102
    %s105 = sphi 0, %s104
    %s119 = sphi 0, %s105
    %s127 = sphi 0, %s129
    %s130 = sphi 0, %s127
    %s131 = sphi 0, %s130
    %s147 = sphi 0, %s131
    %s155 = sphi 0, %s157
    %s158 = sphi 0, %s155
    %s159 = sphi 0, %s158
    %s175 = sphi 0, %s159
  $region4: #{bottleneck_forward.6} parent=0 // loop_header_branch
    %15 = sbr.rel (%p13) target = $region8
  $region5: #{bottleneck_forward.6} parent=0 // loop_body
    %s17 = ssub.s32 %s12, 1
    %s18 = ssub.s32 %s12, 2
    %s25 = sadd.s32 1, %s20
    %p26 = scmp.ge.s32.totalorder %s25, 1
    %s27 = scalar_select %p26, 0, %s25
    %s28 = sadd.s32 1, %s19
    %s29 = scalar_select %p26, %s28, %s19
    %p30 = scmp.ge.s32.totalorder %s29, 2
    %s31 = scalar_select %p30, 0, %s29
    %s32 = ssub.s32 %s19, %s31
    %s33 = ssub.s32 %s20, %s27
    %s34 = sor.u32 %s32, %s33
    %p35 = scmp.eq.s32.totalorder %s34, 0
    %s37 = sadd.s32 %s36, 1
    %s38 = scalar_select %p35, %s36, %s37
    %p41 = pneg %p35
    %p42 = scmp.eq.s32.totalorder %s12, 1
    %p43 = por %p41, %p42
    %p44 = scmp.ne.s32.totalorder %s36, %s39
    %p45 = scmp.eq.s32.totalorder %s12, 0
    %p46 = por %p44, %p45
    %p47 = scmp.ne.s32.totalorder %s36, %s39
    %p48 = scmp.eq.s32.totalorder %s17, 1
    %p49 = por %p47, %p48
    %p50 = scmp.ne.s32.totalorder %s39, %s40
    %p51 = scmp.eq.s32.totalorder %s17, 0
    %p52 = por %p50, %p51
    %p53 = scmp.ne.s32.totalorder %s39, %s40
    %p54 = scmp.eq.s32.totalorder %s18, 1
    %p55 = por %p53, %p54
    %p57 = scmp.ne.s32.totalorder %s40, %s56
    %p58 = scmp.eq.s32.totalorder %s18, 0
    %p59 = por %p57, %p58
    %s61 = sadd.s32 %s60, 1
    %p64 = scmp.eq.s32.totalorder %s12, 1
    %p65 = scmp.ne.s32.totalorder %s60, %s62
    %p66 = scmp.eq.s32.totalorder %s12, 0
    %p67 = por %p65, %p66
    %p68 = scmp.ne.s32.totalorder %s60, %s62
    %p69 = scmp.eq.s32.totalorder %s17, 1
    %p70 = por %p68, %p69
    %p71 = scmp.ne.s32.totalorder %s62, %s63
    %p72 = scmp.eq.s32.totalorder %s17, 0
    %p73 = por %p71, %p72
    %p74 = scmp.ne.s32.totalorder %s62, %s63
    %p75 = scmp.eq.s32.totalorder %s18, 1
    %p76 = por %p74, %p75
    %p78 = scmp.ne.s32.totalorder %s63, %s77
    %p79 = scmp.eq.s32.totalorder %s18, 0
    %p80 = por %p78, %p79
    %s82 = sadd.s32 %s81, 1
    %p85 = scmp.eq.s32.totalorder %s12, 1
    %p86 = scmp.ne.s32.totalorder %s81, %s83
    %p87 = scmp.eq.s32.totalorder %s12, 0
    %p88 = por %p86, %p87
    %p89 = scmp.ne.s32.totalorder %s81, %s83
    %p90 = scmp.eq.s32.totalorder %s17, 1
    %p91 = por %p89, %p90
    %p92 = scmp.ne.s32.totalorder %s83, %s84
    %p93 = scmp.eq.s32.totalorder %s17, 0
    %p94 = por %p92, %p93
    %p95 = scmp.ne.s32.totalorder %s83, %s84
    %p96 = scmp.eq.s32.totalorder %s18, 1
    %p97 = por %p95, %p96
    %p99 = scmp.ne.s32.totalorder %s84, %s98
    %p100 = scmp.eq.s32.totalorder %s18, 0
    %p101 = por %p99, %p100
    %s103 = sadd.s32 %s102, 1
    %p106 = scmp.eq.s32.totalorder %s12, 1
    %p107 = scmp.ne.s32.totalorder %s102, %s104
    %p108 = scmp.eq.s32.totalorder %s12, 0
    %p109 = por %p107, %p108
    %p110 = scmp.ne.s32.totalorder %s102, %s104
    %p111 = scmp.eq.s32.totalorder %s17, 1
    %p112 = por %p110, %p111
    %p113 = scmp.ne.s32.totalorder %s104, %s105
    %p114 = scmp.eq.s32.totalorder %s17, 0
    %p115 = por %p113, %p114
    %p116 = scmp.ne.s32.totalorder %s104, %s105
    %p117 = scmp.eq.s32.totalorder %s18, 1
    %p118 = por %p116, %p117
    %p120 = scmp.ne.s32.totalorder %s105, %s119
    %p121 = scmp.eq.s32.totalorder %s18, 0
    %p122 = por %p120, %p121
    %s123 = ssub.s32 %s19, %s31
    %s124 = ssub.s32 %s20, %s27
    %s125 = sor.u32 %s123, %s124
    %p126 = scmp.eq.s32.totalorder %s125, 0
    %s128 = sadd.s32 %s127, 1
    %s129 = scalar_select %p126, %s127, %s128
    %p132 = pneg %p126
    %p133 = scmp.eq.s32.totalorder %s12, 1
    %p134 = por %p132, %p133
    %p135 = scmp.ne.s32.totalorder %s127, %s130
    %p136 = scmp.eq.s32.totalorder %s12, 0
    %p137 = por %p135, %p136
    %p138 = scmp.ne.s32.totalorder %s127, %s130
    %p139 = scmp.eq.s32.totalorder %s17, 1
    %p140 = por %p138, %p139
    %p141 = scmp.ne.s32.totalorder %s130, %s131
    %p142 = scmp.eq.s32.totalorder %s17, 0
    %p143 = por %p141, %p142
    %p144 = scmp.ne.s32.totalorder %s130, %s131
    %p145 = scmp.eq.s32.totalorder %s18, 1
    %p146 = por %p144, %p145
    %p148 = scmp.ne.s32.totalorder %s131, %s147
    %p149 = scmp.eq.s32.totalorder %s18, 0
    %p150 = por %p148, %p149
    %s151 = ssub.s32 %s19, %s31
    %s152 = ssub.s32 %s20, %s27
    %s153 = sor.u32 %s151, %s152
    %p154 = scmp.eq.s32.totalorder %s153, 0
    %s156 = sadd.s32 %s155, 1
    %s157 = scalar_select %p154, %s155, %s156
    %p160 = pneg %p154
    %p161 = scmp.eq.s32.totalorder %s12, 1
    %p162 = por %p160, %p161
    %p163 = scmp.ne.s32.totalorder %s155, %s158
    %p164 = scmp.eq.s32.totalorder %s12, 0
    %p165 = por %p163, %p164
    %p166 = scmp.ne.s32.totalorder %s155, %s158
    %p167 = scmp.eq.s32.totalorder %s17, 1
    %p168 = por %p166, %p167
    %p169 = scmp.ne.s32.totalorder %s158, %s159
    %p170 = scmp.eq.s32.totalorder %s17, 0
    %p171 = por %p169, %p170
    %p172 = scmp.ne.s32.totalorder %s158, %s159
    %p173 = scmp.eq.s32.totalorder %s18, 1
    %p174 = por %p172, %p173
    %p176 = scmp.ne.s32.totalorder %s159, %s175
    %p177 = scmp.eq.s32.totalorder %s18, 0
    %p178 = por %p176, %p177
    %p179 = scmp.le.s32.totalorder 1, %s12
    %p180 = scmp.lt.s32.totalorder %s12, 3
    %p181 = pnand %p179, %p180
    %p182 = pneg %p181
    // Predicated region
    $region9: #{bottleneck_forward.6} parent=5 // pred_check
      _
    $region10: #{bottleneck_forward.6} parent=5 // pred_check_branch
      %184 = sbr.rel (%p181) target = $region12
    $region11: #{bottleneck_forward.6} parent=5 // pred_region
      %s185 = ssub.s32 %s12, 1
      // Predicated region
      $region13: #{bottleneck_forward.6} parent=11 // pred_check
        %p186 = pneg %p73
      $region14: #{bottleneck_forward.6} parent=11 // pred_check_branch
        %188 = sbr.rel (%p186) target = $region16
      $region15: #{bottleneck_forward.6} parent=11 // pred_region
        _
      $region16: #{bottleneck_forward.6} parent=11 // pred_fallthru
        _
      // Predicated region
      $region17: #{bottleneck_forward.6} parent=11 // pred_check
        %p189 = pneg %p94
      $region18: #{bottleneck_forward.6} parent=11 // pred_check_branch
        %191 = sbr.rel (%p189) target = $region20
      $region19: #{bottleneck_forward.6} parent=11 // pred_region
        _
      $region20: #{bottleneck_forward.6} parent=11 // pred_fallthru
        _
      // Predicated region
      $region21: #{bottleneck_forward.6} parent=11 // pred_check
        %p192 = pneg %p115
      $region22: #{bottleneck_forward.6} parent=11 // pred_check_branch
        %194 = sbr.rel (%p192) target = $region24
      $region23: #{bottleneck_forward.6} parent=11 // pred_region
        _
      $region24: #{bottleneck_forward.6} parent=11 // pred_fallthru
        _
    $region12: #{bottleneck_forward.6} parent=5 // pred_fallthru
      _
    %p195 = scmp.lt.s32.totalorder %s12, 2
    // Predicated region
    $region25: #{bottleneck_forward.6} parent=5 // pred_check
      %p196 = pneg %p195
    $region26: #{bottleneck_forward.6} parent=5 // pred_check_branch
      %198 = sbr.rel (%p196) target = $region28
    $region27: #{bottleneck_forward.6} parent=5 // pred_region
      // Predicated region
      $region29: #{bottleneck_forward.6} parent=27 // pred_check
        %p199 = pneg %p46
      $region30: #{bottleneck_forward.6} parent=27 // pred_check_branch
        %201 = sbr.rel (%p199) target = $region32
      $region31: #{bottleneck_forward.6} parent=27 // pred_region
        %p202 = scmp.lt.s32.totalorder %s19, 1
        %s203 = scalar_select %p202, %s19, 1
        %p204 = scmp.lt.s32.totalorder %s20, 0
        %s205 = scalar_select %p204, %s20, 0
        %s206 = sadd.s32 %s205, %s203
        %s207 = smul.addr %s206, 2
        %s208 = scalar_lea.vmem %s0, %s207
      $region32: #{bottleneck_forward.6} parent=27 // pred_fallthru
        _
    $region28: #{bottleneck_forward.6} parent=5 // pred_fallthru
      _
    %p209 = scmp.le.s32.totalorder 1, %s12
    %p210 = scmp.lt.s32.totalorder %s12, 3
    %p211 = pnand %p209, %p210
    %p212 = pneg %p211
    // Predicated region
    $region33: #{bottleneck_forward.6} parent=5 // pred_check
      _
    $region34: #{bottleneck_forward.6} parent=5 // pred_check_branch
      %214 = sbr.rel (%p211) target = $region36
    $region35: #{bottleneck_forward.6} parent=5 // pred_region
      %s215 = ssub.s32 %s12, 1
      %p216 = scmp.lt.s32.totalorder %s21, 1
      %s217 = scalar_select %p216, %s21, 1
      %p218 = scmp.lt.s32.totalorder %s22, 0
      %s219 = scalar_select %p218, %s22, 0
      %s220 = sadd.s32 %s219, %s217
      %s221 = smul.addr %s220, 2
      %s222 = scalar_lea.vmem %s0, %s221
      %p223 = pneg %p52
      %p224 = pneg %p49
      %p225 = pneg %p73
      %p226 = pneg %p70
      %p227 = pneg %p94
      %p228 = pneg %p91
      %p229 = pneg %p115
      %p230 = pneg %p112
      %p231 = pneg %p143
      %p232 = pneg %p140
      %p233 = scmp.lt.s32.totalorder %s21, 1
      %s234 = scalar_select %p233, %s21, 1
      %p235 = scmp.lt.s32.totalorder %s22, 0
      %s236 = scalar_select %p235, %s22, 0
      %s237 = smul.addr %s234, 2
      %s238 = sadd.s32 %s236, %s237
      %s239 = smul.addr %s238, 4
      %s240 = scalar_lea.vmem %s4, %s239
      %p241 = pneg %p171
      %p242 = pneg %p168
      %p243 = scmp.lt.s32.totalorder %s21, 1
      %s244 = scalar_select %p243, %s21, 1
      %p245 = scmp.lt.s32.totalorder %s22, 0
      %s246 = scalar_select %p245, %s22, 0
      %s247 = sadd.s32 %s246, %s244
      %s248 = smul.addr %s247, 2
      %s249 = scalar_lea.vmem %s5, %s248
      %p250 = scmp.lt.s32.totalorder %s21, 1
      %s251 = scalar_select %p250, %s21, 1
      %p252 = scmp.lt.s32.totalorder %s22, 0
      %s253 = scalar_select %p252, %s22, 0
      %s254 = sadd.s32 %s253, %s251
      %s255 = smul.addr %s254, 2
      %s256 = scalar_lea.vmem %s0, %s255
      %p257 = scmp.lt.s32.totalorder %s21, 1
      %s258 = scalar_select %p257, %s21, 1
      %p259 = scmp.lt.s32.totalorder %s22, 0
      %s260 = scalar_select %p259, %s22, 0
      %s261 = smul.addr %s258, 2
      %s262 = sadd.s32 %s260, %s261
      %s263 = smul.addr %s262, 4
      %s264 = scalar_lea.vmem %s4, %s263
      %p265 = scmp.lt.s32.totalorder %s21, 1
      %s266 = scalar_select %p265, %s21, 1
      %p267 = scmp.lt.s32.totalorder %s22, 0
      %s268 = scalar_select %p267, %s22, 0
      %s269 = sadd.s32 %s268, %s266
      %s270 = smul.addr %s269, 2
      %s271 = scalar_lea.vmem %s5, %s270
      %v273 = vld [vmem:[%s256] sm:$0x3]
      %v274 = vunpack.c.l.bf16 %v273
      %v275 = vld [vmem:[%s1] sm:$0xf]
      %277 = vset.pattern.permute.xlu0 0
      %278 = vperm.xlu0 %277, %v275
      %v279 = vpop.permute.xlu0 %278
      %v281 = vmul.f32 %v274, %v279
      %v282 = vld [vmem:[%s2] sm:$0xf]
      %284 = vset.pattern.permute.xlu0 0
      %285 = vperm.xlu0 %284, %v282
      %v286 = vpop.permute.xlu0 %285
      %v288 = vadd.f32 %v281, %v286
      %v289 = vmax.f32 %v288, 0.0
      %v290 = vld [vmem:[%s3] sm:$0xf]
      %v291 = vld [vmem:[%s3 + $0x4] sm:$0xf]
      %v292 = vpack.c.bf16 %v289, %v289
      %v295 = vunpack.c.l.b16 %v290
      %v296 = vunpack.c.l.b16 %v291
      %v297 = vpack.c.b16 %v296, %v295
      %vm298 = vcmask 31744
      %v300 = vsel %vm298, %v297, 0
      %vm302 = vcmask 1041408
      %v304 = vsel %vm302, %v292, 0
      %306 = vmatprep.subr.bf16.mxu0 0
      %307 = vmatpush1.bf16.msra.mxu0 %v304
      %308 = vmatprep.subr.bf16.mxu0 0
      %309 = vmatpush1.bf16.msra.mxu0 0
      %310 = vmatprep.subr.bf16.mxu0 0
      %311 = vmatpush1.bf16.msra.mxu0 0
      %312 = vmatprep.subr.bf16.mxu0 0
      %313 = vmatpush1.bf16.msra.mxu0 0
      %314 = vmatprep.subr.bf16.mxu0 0
      %315 = vmatpush1.bf16.msra.mxu0 0
      %316 = vmatprep.subr.bf16.mxu0 0
      %317 = vmatpush1.bf16.msra.mxu0 0
      %318 = vmatprep.subr.bf16.mxu0 0
      %319 = vmatpush1.bf16.msra.mxu0 0
      %320 = vmatprep.subr.bf16.mxu0 0
      %321 = vmatpush1.bf16.msra.mxu0 0
      %322 = vmatprep.subr.bf16.mxu0 0
      %323 = vmatpush1.bf16.msra.mxu0 0
      %324 = vmatprep.subr.bf16.mxu0 0
      %325 = vmatpush1.bf16.msra.mxu0 0
      %326 = vmatprep.subr.bf16.mxu0 0
      %327 = vmatpush1.bf16.msra.mxu0 0
      %328 = vmatprep.subr.bf16.mxu0 0
      %329 = vmatpush1.bf16.msra.mxu0 0
      %330 = vmatprep.subr.bf16.mxu0 0
      %331 = vmatpush1.bf16.msra.mxu0 0
      %332 = vmatprep.subr.bf16.mxu0 0
      %333 = vmatpush1.bf16.msra.mxu0 0
      %334 = vmatprep.subr.bf16.mxu0 0
      %335 = vmatpush1.bf16.msra.mxu0 0
      %336 = vmatprep.subr.bf16.mxu0 0
      %337 = vmatpush1.bf16.msra.mxu0 0
      %338 = vmatprep.mubr.bf16.mxu0 0
      %339 = vmatmul.mubr.bf16.gmra.mrb[0].mxu0 %v300
      %v340 = vpop.f32.mrb[0].mxu0
      %v341 = vadd.f32 0.0, %v340
      %v342 = vpop.f32.mrb[0].mxu0
      %v343 = vpop.f32.mrb[0].mxu0
      %v344 = vadd.f32 0.0, %v343
      %v345 = vpop.f32.mrb[0].mxu0
      %346 = vdwg.mxu0
      %vm347 = vcmask 130048
      %v348 = vsel %vm347, %v341, 0.0
      %349 = vadd.xlane.f32.xlu0 %v348
      %v350 = vpop.xlane.xlu0 %349
      %v351 = vsel %vm347, %v344, 0.0
      %352 = vadd.xlane.f32.xlu0 %v351
      %v353 = vpop.xlane.xlu0 %352
      %v354 = vmul.f32 %v341, %v341
      %v355 = vmul.f32 %v344, %v344
      %v356 = vsel %vm347, %v354, 0.0
      %357 = vadd.xlane.f32.xlu0 %v356
      %v358 = vpop.xlane.xlu0 %357
      %v359 = vsel %vm347, %v355, 0.0
      %360 = vadd.xlane.f32.xlu0 %v359
      %v361 = vpop.xlane.xlu0 %360
      %vm362 = vcmask 7168
      %v363 = vsel %vm362, %v350, %v358
      %v364 = vsel %vm362, %v353, %v361
      %365 = vxpose.xlu0.b32.start [1/16] %v363, 128
      %366 = vxpose.xlu0.b32.cont [2/16] %v364, 128
      %367 = vxpose.xlu0.b32.cont [3/16] 0.0, 128
      %368 = vxpose.xlu0.b32.cont [4/16] 0.0, 128
      %369 = vxpose.xlu0.b32.cont [5/16] 0.0, 128
      %370 = vxpose.xlu0.b32.cont [6/16] 0.0, 128
      %371 = vxpose.xlu0.b32.cont [7/16] 0.0, 128
      %372 = vxpose.xlu0.b32.cont [8/16] 0.0, 128
      %373 = vxpose.xlu0.b32.cont [9/16] 0.0, 128
      %374 = vxpose.xlu0.b32.cont [10/16] 0.0, 128
      %375 = vxpose.xlu0.b32.cont [11/16] 0.0, 128
      %376 = vxpose.xlu0.b32.cont [12/16] 0.0, 128
      %377 = vxpose.xlu0.b32.cont [13/16] 0.0, 128
      %378 = vxpose.xlu0.b32.cont [14/16] 0.0, 128
      %379 = vxpose.xlu0.b32.cont [15/16] 0.0, 128
      %380 = vxpose.xlu0.b32.end [16/16] 0.0, 128
      %v381 = vpop.trf.xlu0
      %v382 = vpop.trf.xlu0
      %v383 = vpop.trf.xlu0
      %v384 = vpop.trf.xlu0
      %v385 = vpop.trf.xlu0
      %v386 = vpop.trf.xlu0
      %v387 = vpop.trf.xlu0
      %v388 = vpop.trf.xlu0
      %v389 = vpop.trf.xlu0
      %v390 = vpop.trf.xlu0
      %v391 = vpop.trf.xlu0
      %v392 = vpop.trf.xlu0
      %v393 = vpop.trf.xlu0
      %v394 = vpop.trf.xlu0
      %v395 = vpop.trf.xlu0
      %v396 = vpop.trf.xlu0
      %vm397 = vcmask 123904
      %398 = vst.msk [vmem:[%s271] sm:$0x3] %vm397, %v381
      %v399 = vpack.c.bf16 %v344, %v341
      %v401 = vunpack.c.l.b16 %v399
      %v402 = vunpack.c.h.b16 %v399
      %v403 = vpack.c.b16 %v401, %v401
      %v404 = vpack.c.b16 %v402, %v402
      %vm407 = vcmask 125952
      %408 = vst.msk [vmem:[%s264] sm:$0xf] %vm407, %v403
      %409 = vst.msk [vmem:[%s264 + $0x4] sm:$0xf] %vm407, %v404
      %p410 = scmp.lt.s32.totalorder %s21, 1
      %s411 = scalar_select %p410, %s21, 1
      %p412 = scmp.lt.s32.totalorder %s22, 0
      %s413 = scalar_select %p412, %s22, 0
      %s414 = smul.addr %s411, 2
      %s415 = sadd.s32 %s413, %s414
      %s416 = smul.addr %s415, 4
      %s417 = scalar_lea.vmem %s4, %s416
      %p418 = scmp.lt.s32.totalorder %s21, 1
      %s419 = scalar_select %p418, %s21, 1
      %p420 = scmp.lt.s32.totalorder %s22, 0
      %s421 = scalar_select %p420, %s22, 0
      %s422 = sadd.s32 %s421, %s419
      %s423 = smul.addr %s422, 2
      %s424 = scalar_lea.vmem %s5, %s423
      // Predicated region
      $region37: #{bottleneck_forward.6} parent=35 // pred_check
        %p425 = pneg %p140
      $region38: #{bottleneck_forward.6} parent=35 // pred_check_branch
        %427 = sbr.rel (%p425) target = $region40
      $region39: #{bottleneck_forward.6} parent=35 // pred_region
        _
      $region40: #{bottleneck_forward.6} parent=35 // pred_fallthru
        _
      // Predicated region
      $region41: #{bottleneck_forward.6} parent=35 // pred_check
        %p428 = pneg %p168
      $region42: #{bottleneck_forward.6} parent=35 // pred_check_branch
        %430 = sbr.rel (%p428) target = $region44
      $region43: #{bottleneck_forward.6} parent=35 // pred_region
        _
      $region44: #{bottleneck_forward.6} parent=35 // pred_fallthru
        _
    $region36: #{bottleneck_forward.6} parent=5 // pred_fallthru
      _
    %p431 = scmp.le.s32.totalorder 2, %s12
    // Predicated region
    $region45: #{bottleneck_forward.6} parent=5 // pred_check
      %p432 = pneg %p431
    $region46: #{bottleneck_forward.6} parent=5 // pred_check_branch
      %434 = sbr.rel (%p432) target = $region48
    $region47: #{bottleneck_forward.6} parent=5 // pred_region
      %s435 = ssub.s32 %s12, 2
      // Predicated region
      $region49: #{bottleneck_forward.6} parent=47 // pred_check
        %p436 = pneg %p146
      $region50: #{bottleneck_forward.6} parent=47 // pred_check_branch
        %438 = sbr.rel (%p436) target = $region52
      $region51: #{bottleneck_forward.6} parent=47 // pred_region
        %p439 = scmp.lt.s32.totalorder %s23, 1
        %s440 = scalar_select %p439, %s23, 1
        %p441 = scmp.lt.s32.totalorder %s24, 0
        %s442 = scalar_select %p441, %s24, 0
        %s443 = smul.addr %s440, 2
        %s444 = sadd.s32 %s442, %s443
        %s445 = smul.addr %s444, 4
        %s446 = scalar_lea.vmem %s4, %s445
      $region52: #{bottleneck_forward.6} parent=47 // pred_fallthru
        _
      // Predicated region
      $region53: #{bottleneck_forward.6} parent=47 // pred_check
        %p447 = pneg %p174
      $region54: #{bottleneck_forward.6} parent=47 // pred_check_branch
        %449 = sbr.rel (%p447) target = $region56
      $region55: #{bottleneck_forward.6} parent=47 // pred_region
        %p450 = scmp.lt.s32.totalorder %s23, 1
        %s451 = scalar_select %p450, %s23, 1
        %p452 = scmp.lt.s32.totalorder %s24, 0
        %s453 = scalar_select %p452, %s24, 0
        %s454 = sadd.s32 %s453, %s451
        %s455 = smul.addr %s454, 2
        %s456 = scalar_lea.vmem %s5, %s455
      $region56: #{bottleneck_forward.6} parent=47 // pred_fallthru
        _
    $region48: #{bottleneck_forward.6} parent=5 // pred_fallthru
      _
  $region6: #{bottleneck_forward.6} parent=0 // loop_footer
    %s16 = sadd.s32 1, %s12
  $region7: #{bottleneck_forward.6} parent=0 // loop_footer_branch
    %11 = sbr.rel target = $region3
  $region8: #{bottleneck_forward.6} parent=0 // loop_exit
    _

// kernel: bottleneck_forward.7
$region0: #{bottleneck_forward.7}
  #allocation0 [shape = 'u32[]', space=smem, size = 0x4, offset = 0x4, fixed_abs, tag = 'smem constant byte address 0x4 - core index']
  #allocation1 [shape = 'u32[144,128]{1,0:T(1,128)}', space=vmem, size = 0x12000, scoped, tag = 'internal scratch']
  %s0 = inlined_call_operand.vmem [shape: bf16[2,16,16], index: 0, kind: input, shape index: {}]
  %s1 = inlined_call_operand.vmem [shape: f32[16,1], index: 1, kind: input, shape index: {}]
  %s2 = inlined_call_operand.vmem [shape: f32[16,1], index: 2, kind: input, shape index: {}]
  %s3 = inlined_call_operand.vmem [shape: f32[2,16,16], index: 3, kind: input, shape index: {}]
  %s4 = inlined_call_operand.hbm [shape: f32[2,16,16], index: 4, kind: output, shape index: {}]
  %s5 = sld [smem:[#allocation0]]
  $region49: #{bottleneck_forward.7} parent=0
    _
  %s7 = ssub.s32 1, %s5
  %s8 = scalar_select 0, %s7, %s5
  $region1: #{bottleneck_forward.7} parent=0
    #allocation2 [shape = 'u8[16384]{0}', space=vmem, size = 0x4000, scoped, tag = 'output window, operand 0']
    #allocation3 [shape = 's32[2]{0}', space=sflag, size = 0x8, scoped, tag = 'scoped memory for bottleneck_forward.7']
    %9 = vsyncpa [#allocation3], 0
    %s10 = scalar_lea.sflag [#allocation3], 1
    %11 = vsyncpa %s10, 0
    loop: start=0, step=1, limit=4
    $region2: #{bottleneck_forward.7} parent=1 // loop_pre_header
      _
    $region3: #{bottleneck_forward.7} parent=1 // loop_header
      %s13 = sphi 0, %s17
      %p14 = scmp.ge.s32.totalorder %s13, 4
      %s20 = sphi 0, %s32
      %s21 = sphi 0, %s28
      %s22 = sphi 0, %s20
      %s23 = sphi 0, %s21
      %s24 = sphi 0, %s22
      %s25 = sphi 0, %s23
      %s37 = sphi 0, %s39
      %s40 = sphi 0, %s37
      %s41 = sphi 0, %s40
      %s57 = sphi 0, %s41
      %s61 = sphi 0, %s61
      %s63 = sphi 0, %s61
      %s64 = sphi 0, %s63
      %s78 = sphi 0, %s64
      %s82 = sphi 0, %s82
      %s84 = sphi 0, %s82
      %s85 = sphi 0, %s84
      %s99 = sphi 0, %s85
      %s107 = sphi 0, %s109
      %s110 = sphi 0, %s107
      %s111 = sphi 0, %s110
      %s127 = sphi 0, %s111
      %s135 = sphi 0, %s137
      %s138 = sphi 0, %s135
      %s139 = sphi 0, %s138
      %s155 = sphi 0, %s139
    $region4: #{bottleneck_forward.7} parent=1 // loop_header_branch
      %16 = sbr.rel (%p14) target = $region8
    $region5: #{bottleneck_forward.7} parent=1 // loop_body
      %s18 = ssub.s32 %s13, 1
      %s19 = ssub.s32 %s13, 2
      %s26 = sadd.s32 1, %s21
      %p27 = scmp.ge.s32.totalorder %s26, 1
      %s28 = scalar_select %p27, 0, %s26
      %s29 = sadd.s32 1, %s20
      %s30 = scalar_select %p27, %s29, %s20
      %p31 = scmp.ge.s32.totalorder %s30, 2
      %s32 = scalar_select %p31, 0, %s30
      %s33 = ssub.s32 %s20, %s32
      %s34 = ssub.s32 %s21, %s28
      %s35 = sor.u32 %s33, %s34
      %p36 = scmp.eq.s32.totalorder %s35, 0
      %s38 = sadd.s32 %s37, 1
      %s39 = scalar_select %p36, %s37, %s38
      %p42 = pneg %p36
      %p43 = scmp.eq.s32.totalorder %s13, 1
      %p44 = por %p42, %p43
      %p45 = scmp.ne.s32.totalorder %s37, %s40
      %p46 = scmp.eq.s32.totalorder %s13, 0
      %p47 = por %p45, %p46
      %p48 = scmp.ne.s32.totalorder %s37, %s40
      %p49 = scmp.eq.s32.totalorder %s18, 1
      %p50 = por %p48, %p49
      %p51 = scmp.ne.s32.totalorder %s40, %s41
      %p52 = scmp.eq.s32.totalorder %s18, 0
      %p53 = por %p51, %p52
      %p54 = scmp.ne.s32.totalorder %s40, %s41
      %p55 = scmp.eq.s32.totalorder %s19, 1
      %p56 = por %p54, %p55
      %p58 = scmp.ne.s32.totalorder %s41, %s57
      %p59 = scmp.eq.s32.totalorder %s19, 0
      %p60 = por %p58, %p59
      %s62 = sadd.s32 %s61, 1
      %p65 = scmp.eq.s32.totalorder %s13, 1
      %p66 = scmp.ne.s32.totalorder %s61, %s63
      %p67 = scmp.eq.s32.totalorder %s13, 0
      %p68 = por %p66, %p67
      %p69 = scmp.ne.s32.totalorder %s61, %s63
      %p70 = scmp.eq.s32.totalorder %s18, 1
      %p71 = por %p69, %p70
      %p72 = scmp.ne.s32.totalorder %s63, %s64
      %p73 = scmp.eq.s32.totalorder %s18, 0
      %p74 = por %p72, %p73
      %p75 = scmp.ne.s32.totalorder %s63, %s64
      %p76 = scmp.eq.s32.totalorder %s19, 1
      %p77 = por %p75, %p76
      %p79 = scmp.ne.s32.totalorder %s64, %s78
      %p80 = scmp.eq.s32.totalorder %s19, 0
      %p81 = por %p79, %p80
      %s83 = sadd.s32 %s82, 1
      %p86 = scmp.eq.s32.totalorder %s13, 1
      %p87 = scmp.ne.s32.totalorder %s82, %s84
      %p88 = scmp.eq.s32.totalorder %s13, 0
      %p89 = por %p87, %p88
      %p90 = scmp.ne.s32.totalorder %s82, %s84
      %p91 = scmp.eq.s32.totalorder %s18, 1
      %p92 = por %p90, %p91
      %p93 = scmp.ne.s32.totalorder %s84, %s85
      %p94 = scmp.eq.s32.totalorder %s18, 0
      %p95 = por %p93, %p94
      %p96 = scmp.ne.s32.totalorder %s84, %s85
      %p97 = scmp.eq.s32.totalorder %s19, 1
      %p98 = por %p96, %p97
      %p100 = scmp.ne.s32.totalorder %s85, %s99
      %p101 = scmp.eq.s32.totalorder %s19, 0
      %p102 = por %p100, %p101
      %s103 = ssub.s32 %s20, %s32
      %s104 = ssub.s32 %s21, %s28
      %s105 = sor.u32 %s103, %s104
      %p106 = scmp.eq.s32.totalorder %s105, 0
      %s108 = sadd.s32 %s107, 1
      %s109 = scalar_select %p106, %s107, %s108
      %p112 = pneg %p106
      %p113 = scmp.eq.s32.totalorder %s13, 1
      %p114 = por %p112, %p113
      %p115 = scmp.ne.s32.totalorder %s107, %s110
      %p116 = scmp.eq.s32.totalorder %s13, 0
      %p117 = por %p115, %p116
      %p118 = scmp.ne.s32.totalorder %s107, %s110
      %p119 = scmp.eq.s32.totalorder %s18, 1
      %p120 = por %p118, %p119
      %p121 = scmp.ne.s32.totalorder %s110, %s111
      %p122 = scmp.eq.s32.totalorder %s18, 0
      %p123 = por %p121, %p122
      %p124 = scmp.ne.s32.totalorder %s110, %s111
      %p125 = scmp.eq.s32.totalorder %s19, 1
      %p126 = por %p124, %p125
      %p128 = scmp.ne.s32.totalorder %s111, %s127
      %p129 = scmp.eq.s32.totalorder %s19, 0
      %p130 = por %p128, %p129
      %s131 = ssub.s32 %s20, %s32
      %s132 = ssub.s32 %s21, %s28
      %s133 = sor.u32 %s131, %s132
      %p134 = scmp.eq.s32.totalorder %s133, 0
      %s136 = sadd.s32 %s135, 1
      %s137 = scalar_select %p134, %s135, %s136
      %p140 = pneg %p134
      %p141 = scmp.eq.s32.totalorder %s13, 1
      %p142 = por %p140, %p141
      %p143 = scmp.ne.s32.totalorder %s135, %s138
      %p144 = scmp.eq.s32.totalorder %s13, 0
      %p145 = por %p143, %p144
      %p146 = scmp.ne.s32.totalorder %s135, %s138
      %p147 = scmp.eq.s32.totalorder %s18, 1
      %p148 = por %p146, %p147
      %p149 = scmp.ne.s32.totalorder %s138, %s139
      %p150 = scmp.eq.s32.totalorder %s18, 0
      %p151 = por %p149, %p150
      %p152 = scmp.ne.s32.totalorder %s138, %s139
      %p153 = scmp.eq.s32.totalorder %s19, 1
      %p154 = por %p152, %p153
      %p156 = scmp.ne.s32.totalorder %s139, %s155
      %p157 = scmp.eq.s32.totalorder %s19, 0
      %p158 = por %p156, %p157
      %p159 = scmp.le.s32.totalorder 1, %s13
      %p160 = scmp.lt.s32.totalorder %s13, 3
      %p161 = pnand %p159, %p160
      %p162 = pneg %p161
      // Predicated region
      $region9: #{bottleneck_forward.7} parent=5 // pred_check
        _
      $region10: #{bottleneck_forward.7} parent=5 // pred_check_branch
        %164 = sbr.rel (%p161) target = $region12
      $region11: #{bottleneck_forward.7} parent=5 // pred_region
        %s165 = ssub.s32 %s13, 1
        // Predicated region
        $region13: #{bottleneck_forward.7} parent=11 // pred_check
          %p166 = pneg %p74
        $region14: #{bottleneck_forward.7} parent=11 // pred_check_branch
          %168 = sbr.rel (%p166) target = $region16
        $region15: #{bottleneck_forward.7} parent=11 // pred_region
          _
        $region16: #{bottleneck_forward.7} parent=11 // pred_fallthru
          _
        // Predicated region
        $region17: #{bottleneck_forward.7} parent=11 // pred_check
          %p169 = pneg %p95
        $region18: #{bottleneck_forward.7} parent=11 // pred_check_branch
          %171 = sbr.rel (%p169) target = $region20
        $region19: #{bottleneck_forward.7} parent=11 // pred_region
          _
        $region20: #{bottleneck_forward.7} parent=11 // pred_fallthru
          _
      $region12: #{bottleneck_forward.7} parent=5 // pred_fallthru
        _
      %p172 = scmp.lt.s32.totalorder %s13, 2
      // Predicated region
      $region21: #{bottleneck_forward.7} parent=5 // pred_check
        %p173 = pneg %p172
      $region22: #{bottleneck_forward.7} parent=5 // pred_check_branch
        %175 = sbr.rel (%p173) target = $region24
      $region23: #{bottleneck_forward.7} parent=5 // pred_region
        // Predicated region
        $region25: #{bottleneck_forward.7} parent=23 // pred_check
          %p176 = pneg %p47
        $region26: #{bottleneck_forward.7} parent=23 // pred_check_branch
          %178 = sbr.rel (%p176) target = $region28
        $region27: #{bottleneck_forward.7} parent=23 // pred_region
          %p179 = scmp.lt.s32.totalorder %s20, 1
          %s180 = scalar_select %p179, %s20, 1
          %p181 = scmp.lt.s32.totalorder %s21, 0
          %s182 = scalar_select %p181, %s21, 0
          %s183 = smul.addr %s180, 2
          %s184 = sadd.s32 %s182, %s183
          %s185 = smul.addr %s184, 4
          %s186 = scalar_lea.vmem %s0, %s185
        $region28: #{bottleneck_forward.7} parent=23 // pred_fallthru
          _
        // Predicated region
        $region29: #{bottleneck_forward.7} parent=23 // pred_check
          %p187 = pneg %p117
        $region30: #{bottleneck_forward.7} parent=23 // pred_check_branch
          %189 = sbr.rel (%p187) target = $region32
        $region31: #{bottleneck_forward.7} parent=23 // pred_region
          %p190 = scmp.lt.s32.totalorder %s20, 1
          %s191 = scalar_select %p190, %s20, 1
          %p192 = scmp.lt.s32.totalorder %s21, 0
          %s193 = scalar_select %p192, %s21, 0
          %s194 = smul.addr %s191, 2
          %s195 = sadd.s32 %s193, %s194
          %s196 = smul.addr %s195, 8
          %s197 = scalar_lea.vmem %s3, %s196
        $region32: #{bottleneck_forward.7} parent=23 // pred_fallthru
          _
      $region24: #{bottleneck_forward.7} parent=5 // pred_fallthru
        _
      %p198 = scmp.le.s32.totalorder 1, %s13
      %p199 = scmp.lt.s32.totalorder %s13, 3
      %p200 = pnand %p198, %p199
      %p201 = pneg %p200
      // Predicated region
      $region33: #{bottleneck_forward.7} parent=5 // pred_check
        _
      $region34: #{bottleneck_forward.7} parent=5 // pred_check_branch
        %203 = sbr.rel (%p200) target = $region36
      $region35: #{bottleneck_forward.7} parent=5 // pred_region
        %s204 = ssub.s32 %s13, 1
        %p205 = scmp.lt.s32.totalorder %s22, 1
        %s206 = scalar_select %p205, %s22, 1
        %p207 = scmp.lt.s32.totalorder %s23, 0
        %s208 = scalar_select %p207, %s23, 0
        %s209 = smul.addr %s206, 2
        %s210 = sadd.s32 %s208, %s209
        %s211 = smul.addr %s210, 4
        %s212 = scalar_lea.vmem %s0, %s211
        %p213 = pneg %p53
        %p214 = pneg %p50
        %p215 = pneg %p74
        %p216 = pneg %p71
        %p217 = pneg %p95
        %p218 = pneg %p92
        %p219 = scmp.lt.s32.totalorder %s22, 1
        %s220 = scalar_select %p219, %s22, 1
        %p221 = scmp.lt.s32.totalorder %s23, 0
        %s222 = scalar_select %p221, %s23, 0
        %s223 = smul.addr %s220, 2
        %s224 = sadd.s32 %s222, %s223
        %s225 = smul.addr %s224, 8
        %s226 = scalar_lea.vmem %s3, %s225
        %p227 = pneg %p123
        %p228 = pneg %p120
        %p229 = pneg %p151
        %p230 = pneg %p148
        %s231 = sand.u32 %s138, 1
        %s232 = scalar_lea.sflag [#allocation3], %s231
        %s233 = sand.u32 %s138, 1
        %s234 = smul.addr %s233, 16
        %s235 = scalar_lea.vmem [#allocation2], %s234
        %p236 = scmp.lt.s32.totalorder %s22, 1
        %s237 = scalar_select %p236, %s22, 1
        %p238 = scmp.lt.s32.totalorder %s23, 0
        %s239 = scalar_select %p238, %s23, 0
        %s240 = smul.addr %s237, 2
        %s241 = sadd.s32 %s239, %s240
        %s242 = smul.addr %s241, 4
        %s243 = scalar_lea.vmem %s0, %s242
        %p244 = scmp.lt.s32.totalorder %s22, 1
        %s245 = scalar_select %p244, %s22, 1
        %p246 = scmp.lt.s32.totalorder %s23, 0
        %s247 = scalar_select %p246, %s23, 0
        %s248 = smul.addr %s245, 2
        %s249 = sadd.s32 %s247, %s248
        %s250 = smul.addr %s249, 8
        %s251 = scalar_lea.vmem %s3, %s250
        %v252 = vld [vmem:[%s243] sm:$0xf]
        %v253 = vld [vmem:[%s243 + $0x4] sm:$0xf]
        %v254 = vunpack.c.l.bf16 %v252
        %v255 = vunpack.c.l.bf16 %v253
        %v256 = vld [vmem:[%s1] sm:$0xff]
        %v257 = vld [vmem:[%s1 + $0x8] sm:$0xff]
        %259 = vset.pattern.permute.xlu0 0
        %260 = vperm.xlu0 %259, %v256
        %v261 = vpop.permute.xlu0 %260
        %264 = vset.pattern.permute.xlu0 0
        %265 = vperm.xlu0 %264, %v257
        %v266 = vpop.permute.xlu0 %265
        %v268 = vmul.f32 %v254, %v261
        %v269 = vmul.f32 %v255, %v266
        %v270 = vld [vmem:[%s2] sm:$0xff]
        %v271 = vld [vmem:[%s2 + $0x8] sm:$0xff]
        %273 = vset.pattern.permute.xlu0 0
        %274 = vperm.xlu0 %273, %v270
        %v275 = vpop.permute.xlu0 %274
        %278 = vset.pattern.permute.xlu0 0
        %279 = vperm.xlu0 %278, %v271
        %v280 = vpop.permute.xlu0 %279
        %v282 = vadd.f32 %v268, %v275
        %v283 = vadd.f32 %v269, %v280
        %v284 = vld [vmem:[%s251] sm:$0xff]
        %v285 = vld [vmem:[%s251 + $0x8] sm:$0xff]
        %v286 = vadd.f32 %v282, %v284
        %v287 = vadd.f32 %v283, %v285
        %v288 = vmax.f32 %v286, 0.0
        %v289 = vmax.f32 %v287, 0.0
        %vm290 = vcmask 130048
        %291 = vst.msk [vmem:[%s235] sm:$0xff] %vm290, %v288
        %292 = vst.msk [vmem:[%s235 + $0x8] sm:$0xff] %vm290, %v289
        %s293 = sand.u32 %s138, 1
        %s294 = scalar_lea.sflag [#allocation3], %s293
        %s295 = sand.u32 %s138, 1
        %s296 = smul.addr %s295, 16
        %s297 = scalar_lea.vmem [#allocation2], %s296
        // Predicated region
        $region37: #{bottleneck_forward.7} parent=35 // pred_check
          %p298 = pneg %p148
        $region38: #{bottleneck_forward.7} parent=35 // pred_check_branch
          %300 = sbr.rel (%p298) target = $region40
        $region39: #{bottleneck_forward.7} parent=35 // pred_region
          %s302 = ssub.s32 256, 256
          %303 = vsyncadd %s294, %s302
          %s304 = smul.addr %s22, 2
          %s305 = sadd.s32 %s23, %s304
          %s306 = smul.addr %s305, 128
          %s307 = scalar_lea.hbm %s4, %s306
          %s308 = sshll.u32 %s297, 4
          %s309 = int_to_ptr.vmem [resolvable:$true] %s308
          %314 = dma.vmem_to_hbm [thread:$0]  %s309, 256, %s307, %s294, 128, 128, 8
        $region40: #{bottleneck_forward.7} parent=35 // pred_fallthru
          _
      $region36: #{bottleneck_forward.7} parent=5 // pred_fallthru
        _
      %p315 = scmp.le.s32.totalorder 2, %s13
      // Predicated region
      $region41: #{bottleneck_forward.7} parent=5 // pred_check
        %p316 = pneg %p315
      $region42: #{bottleneck_forward.7} parent=5 // pred_check_branch
        %318 = sbr.rel (%p316) target = $region44
      $region43: #{bottleneck_forward.7} parent=5 // pred_region
        %s319 = ssub.s32 %s13, 2
        // Predicated region
        $region45: #{bottleneck_forward.7} parent=43 // pred_check
          %p320 = pneg %p154
        $region46: #{bottleneck_forward.7} parent=43 // pred_check_branch
          %322 = sbr.rel (%p320) target = $region48
        $region47: #{bottleneck_forward.7} parent=43 // pred_region
          %s323 = sand.u32 %s139, 1
          %s324 = scalar_lea.sflag [#allocation3], %s323
          %s325 = sand.u32 %s139, 1
          %s326 = smul.addr %s325, 16
          %s327 = scalar_lea.vmem [#allocation2], %s326
          %328 = dma.done %s324, 256
        $region48: #{bottleneck_forward.7} parent=43 // pred_fallthru
          _
      $region44: #{bottleneck_forward.7} parent=5 // pred_fallthru
        _
    $region6: #{bottleneck_forward.7} parent=1 // loop_footer
      %s17 = sadd.s32 1, %s13
    $region7: #{bottleneck_forward.7} parent=1 // loop_footer_branch
      %12 = sbr.rel target = $region3
    $region8: #{bottleneck_forward.7} parent=1 // loop_exit
      _
    %329 = vsyncpa [#allocation3], 1
    %s330 = scalar_lea.sflag [#allocation3], 1
    %331 = vsyncpa %s330, 1

// kernel: bottleneck_forward.5
$region0: #{bottleneck_forward.5}
  #allocation0 [shape = 'u32[]', space=smem, size = 0x4, offset = 0x4, fixed_abs, tag = 'smem constant byte address 0x4 - core index']
  #allocation1 [shape = 'u32[144,128]{1,0:T(1,128)}', space=vmem, size = 0x12000, scoped, tag = 'internal scratch']
  %s0 = inlined_call_operand.vmem [shape: bf16[2,4,16], index: 0, kind: input, shape index: {}]
  %s1 = inlined_call_operand.vmem [shape: f32[4,1], index: 1, kind: input, shape index: {}]
  %s2 = inlined_call_operand.vmem [shape: f32[4,1], index: 2, kind: input, shape index: {}]
  %s3 = inlined_call_operand.vmem [shape: bf16[3,4,4], index: 3, kind: input, shape index: {}]
  %s4 = inlined_call_operand.vmem [shape: bf16[2,4,16], index: 4, kind: output, shape index: {0}]
  %s5 = inlined_call_operand.vmem [shape: f32[2,2,4], index: 5, kind: output, shape index: {1}]
  %6 = xla_tuple %s4, %s5
  %s7 = sld [smem:[#allocation0]]
  $region57: #{bottleneck_forward.5} parent=0
    _
  %s9 = ssub.s32 1, %s7
  %s10 = scalar_select 0, %s9, %s7
  loop: start=0, step=1, limit=4
  $region2: #{bottleneck_forward.5} parent=0 // loop_pre_header
    _
  $region3: #{bottleneck_forward.5} parent=0 // loop_header
    %s12 = sphi 0, %s16
    %p13 = scmp.ge.s32.totalorder %s12, 4
    %s22 = sphi 0, %s24
    %s25 = sphi 0, %s22
    %s26 = sphi 0, %s25
    %s42 = sphi 0, %s26
    %s46 = sphi 0, %s46
    %s48 = sphi 0, %s46
    %s49 = sphi 0, %s48
    %s63 = sphi 0, %s49
    %s67 = sphi 0, %s67
    %s69 = sphi 0, %s67
    %s70 = sphi 0, %s69
    %s84 = sphi 0, %s70
    %s88 = sphi 0, %s88
    %s90 = sphi 0, %s88
    %s91 = sphi 0, %s90
    %s105 = sphi 0, %s91
    %s111 = sphi 0, %s113
    %s114 = sphi 0, %s111
    %s115 = sphi 0, %s114
    %s131 = sphi 0, %s115
    %s137 = sphi 0, %s139
    %s140 = sphi 0, %s137
    %s141 = sphi 0, %s140
    %s157 = sphi 0, %s141
  $region4: #{bottleneck_forward.5} parent=0 // loop_header_branch
    %15 = sbr.rel (%p13) target = $region8
  $region5: #{bottleneck_forward.5} parent=0 // loop_body
    %s17 = ssub.s32 %s12, 1
    %s18 = ssub.s32 %s12, 2
    %s19 = sadd.s32 %s12, 1
    %s20 = ssub.s32 %s12, %s19
    %p21 = scmp.eq.s32.totalorder %s20, 0
    %s23 = sadd.s32 %s22, 1
    %s24 = scalar_select %p21, %s22, %s23
    %p27 = pneg %p21
    %p28 = scmp.eq.s32.totalorder %s12, 1
    %p29 = por %p27, %p28
    %p30 = scmp.ne.s32.totalorder %s22, %s25
    %p31 = scmp.eq.s32.totalorder %s12, 0
    %p32 = por %p30, %p31
    %p33 = scmp.ne.s32.totalorder %s22, %s25
    %p34 = scmp.eq.s32.totalorder %s17, 1
    %p35 = por %p33, %p34
    %p36 = scmp.ne.s32.totalorder %s25, %s26
    %p37 = scmp.eq.s32.totalorder %s17, 0
    %p38 = por %p36, %p37
    %p39 = scmp.ne.s32.totalorder %s25, %s26
    %p40 = scmp.eq.s32.totalorder %s18, 1
    %p41 = por %p39, %p40
    %p43 = scmp.ne.s32.totalorder %s26, %s42
    %p44 = scmp.eq.s32.totalorder %s18, 0
    %p45 = por %p43, %p44
    %s47 = sadd.s32 %s46, 1
    %p50 = scmp.eq.s32.totalorder %s12, 1
    %p51 = scmp.ne.s32.totalorder %s46, %s48
    %p52 = scmp.eq.s32.totalorder %s12, 0
    %p53 = por %p51, %p52
    %p54 = scmp.ne.s32.totalorder %s46, %s48
    %p55 = scmp.eq.s32.totalorder %s17, 1
    %p56 = por %p54, %p55
    %p57 = scmp.ne.s32.totalorder %s48, %s49
    %p58 = scmp.eq.s32.totalorder %s17, 0
    %p59 = por %p57, %p58
    %p60 = scmp.ne.s32.totalorder %s48, %s49
    %p61 = scmp.eq.s32.totalorder %s18, 1
    %p62 = por %p60, %p61
    %p64 = scmp.ne.s32.totalorder %s49, %s63
    %p65 = scmp.eq.s32.totalorder %s18, 0
    %p66 = por %p64, %p65
    %s68 = sadd.s32 %s67, 1
    %p71 = scmp.eq.s32.totalorder %s12, 1
    %p72 = scmp.ne.s32.totalorder %s67, %s69
    %p73 = scmp.eq.s32.totalorder %s12, 0
    %p74 = por %p72, %p73
    %p75 = scmp.ne.s32.totalorder %s67, %s69
    %p76 = scmp.eq.s32.totalorder %s17, 1
    %p77 = por %p75, %p76
    %p78 = scmp.ne.s32.totalorder %s69, %s70
    %p79 = scmp.eq.s32.totalorder %s17, 0
    %p80 = por %p78, %p79
    %p81 = scmp.ne.s32.totalorder %s69, %s70
    %p82 = scmp.eq.s32.totalorder %s18, 1
    %p83 = por %p81, %p82
    %p85 = scmp.ne.s32.totalorder %s70, %s84
    %p86 = scmp.eq.s32.totalorder %s18, 0
    %p87 = por %p85, %p86
    %s89 = sadd.s32 %s88, 1
    %p92 = scmp.eq.s32.totalorder %s12, 1
    %p93 = scmp.ne.s32.totalorder %s88, %s90
    %p94 = scmp.eq.s32.totalorder %s12, 0
    %p95 = por %p93, %p94
    %p96 = scmp.ne.s32.totalorder %s88, %s90
    %p97 = scmp.eq.s32.totalorder %s17, 1
    %p98 = por %p96, %p97
    %p99 = scmp.ne.s32.totalorder %s90, %s91
    %p100 = scmp.eq.s32.totalorder %s17, 0
    %p101 = por %p99, %p100
    %p102 = scmp.ne.s32.totalorder %s90, %s91
    %p103 = scmp.eq.s32.totalorder %s18, 1
    %p104 = por %p102, %p103
    %p106 = scmp.ne.s32.totalorder %s91, %s105
    %p107 = scmp.eq.s32.totalorder %s18, 0
    %p108 = por %p106, %p107
    %s109 = ssub.s32 %s12, %s19
    %p110 = scmp.eq.s32.totalorder %s109, 0
    %s112 = sadd.s32 %s111, 1
    %s113 = scalar_select %p110, %s111, %s112
    %p116 = pneg %p110
    %p117 = scmp.eq.s32.totalorder %s12, 1
    %p118 = por %p116, %p117
    %p119 = scmp.ne.s32.totalorder %s111, %s114
    %p120 = scmp.eq.s32.totalorder %s12, 0
    %p121 = por %p119, %p120
    %p122 = scmp.ne.s32.totalorder %s111, %s114
    %p123 = scmp.eq.s32.totalorder %s17, 1
    %p124 = por %p122, %p123
    %p125 = scmp.ne.s32.totalorder %s114, %s115
    %p126 = scmp.eq.s32.totalorder %s17, 0
    %p127 = por %p125, %p126
    %p128 = scmp.ne.s32.totalorder %s114, %s115
    %p129 = scmp.eq.s32.totalorder %s18, 1
    %p130 = por %p128, %p129
    %p132 = scmp.ne.s32.totalorder %s115, %s131
    %p133 = scmp.eq.s32.totalorder %s18, 0
    %p134 = por %p132, %p133
    %s135 = ssub.s32 %s12, %s19
    %p136 = scmp.eq.s32.totalorder %s135, 0
    %s138 = sadd.s32 %s137, 1
    %s139 = scalar_select %p136, %s137, %s138
    %p142 = pneg %p136
    %p143 = scmp.eq.s32.totalorder %s12, 1
    %p144 = por %p142, %p143
    %p145 = scmp.ne.s32.totalorder %s137, %s140
    %p146 = scmp.eq.s32.totalorder %s12, 0
    %p147 = por %p145, %p146
    %p148 = scmp.ne.s32.totalorder %s137, %s140
    %p149 = scmp.eq.s32.totalorder %s17, 1
    %p150 = por %p148, %p149
    %p151 = scmp.ne.s32.totalorder %s140, %s141
    %p152 = scmp.eq.s32.totalorder %s17, 0
    %p153 = por %p151, %p152
    %p154 = scmp.ne.s32.totalorder %s140, %s141
    %p155 = scmp.eq.s32.totalorder %s18, 1
    %p156 = por %p154, %p155
    %p158 = scmp.ne.s32.totalorder %s141, %s157
    %p159 = scmp.eq.s32.totalorder %s18, 0
    %p160 = por %p158, %p159
    %p161 = scmp.le.s32.totalorder 1, %s12
    %p162 = scmp.lt.s32.totalorder %s12, 3
    %p163 = pnand %p161, %p162
    %p164 = pneg %p163
    // Predicated region
    $region9: #{bottleneck_forward.5} parent=5 // pred_check
      _
    $region10: #{bottleneck_forward.5} parent=5 // pred_check_branch
      %166 = sbr.rel (%p163) target = $region12
    $region11: #{bottleneck_forward.5} parent=5 // pred_region
      %s167 = ssub.s32 %s12, 1
      // Predicated region
      $region13: #{bottleneck_forward.5} parent=11 // pred_check
        %p168 = pneg %p59
      $region14: #{bottleneck_forward.5} parent=11 // pred_check_branch
        %170 = sbr.rel (%p168) target = $region16
      $region15: #{bottleneck_forward.5} parent=11 // pred_region
        _
      $region16: #{bottleneck_forward.5} parent=11 // pred_fallthru
        _
      // Predicated region
      $region17: #{bottleneck_forward.5} parent=11 // pred_check
        %p171 = pneg %p80
      $region18: #{bottleneck_forward.5} parent=11 // pred_check_branch
        %173 = sbr.rel (%p171) target = $region20
      $region19: #{bottleneck_forward.5} parent=11 // pred_region
        _
      $region20: #{bottleneck_forward.5} parent=11 // pred_fallthru
        _
      // Predicated region
      $region21: #{bottleneck_forward.5} parent=11 // pred_check
        %p174 = pneg %p101
      $region22: #{bottleneck_forward.5} parent=11 // pred_check_branch
        %176 = sbr.rel (%p174) target = $region24
      $region23: #{bottleneck_forward.5} parent=11 // pred_region
        _
      $region24: #{bottleneck_forward.5} parent=11 // pred_fallthru
        _
    $region12: #{bottleneck_forward.5} parent=5 // pred_fallthru
      _
    %p177 = scmp.lt.s32.totalorder %s12, 2
    // Predicated region
    $region25: #{bottleneck_forward.5} parent=5 // pred_check
      %p178 = pneg %p177
    $region26: #{bottleneck_forward.5} parent=5 // pred_check_branch
      %180 = sbr.rel (%p178) target = $region28
    $region27: #{bottleneck_forward.5} parent=5 // pred_region
      // Predicated region
      $region29: #{bottleneck_forward.5} parent=27 // pred_check
        %p181 = pneg %p32
      $region30: #{bottleneck_forward.5} parent=27 // pred_check_branch
        %183 = sbr.rel (%p181) target = $region32
      $region31: #{bottleneck_forward.5} parent=27 // pred_region
        %p184 = scmp.lt.s32.totalorder %s12, 1
        %s185 = scalar_select %p184, %s12, 1
        %s186 = smul.addr %s185, 2
        %s187 = scalar_lea.vmem %s0, %s186
      $region32: #{bottleneck_forward.5} parent=27 // pred_fallthru
        _
    $region28: #{bottleneck_forward.5} parent=5 // pred_fallthru
      _
    %p188 = scmp.le.s32.totalorder 1, %s12
    %p189 = scmp.lt.s32.totalorder %s12, 3
    %p190 = pnand %p188, %p189
    %p191 = pneg %p190
    // Predicated region
    $region33: #{bottleneck_forward.5} parent=5 // pred_check
      _
    $region34: #{bottleneck_forward.5} parent=5 // pred_check_branch
      %193 = sbr.rel (%p190) target = $region36
    $region35: #{bottleneck_forward.5} parent=5 // pred_region
      %s194 = ssub.s32 %s12, 1
      %p195 = scmp.lt.s32.totalorder %s17, 1
      %s196 = scalar_select %p195, %s17, 1
      %s197 = smul.addr %s196, 2
      %s198 = scalar_lea.vmem %s0, %s197
      %p199 = pneg %p38
      %p200 = pneg %p35
      %p201 = pneg %p59
      %p202 = pneg %p56
      %p203 = pneg %p80
      %p204 = pneg %p77
      %p205 = pneg %p101
      %p206 = pneg %p98
      %p207 = pneg %p127
      %p208 = pneg %p124
      %p209 = scmp.lt.s32.totalorder %s17, 1
      %s210 = scalar_select %p209, %s17, 1
      %s211 = smul.addr %s210, 2
      %s212 = scalar_lea.vmem %s4, %s211
      %p213 = pneg %p153
      %p214 = pneg %p150
      %p215 = scmp.lt.s32.totalorder %s17, 1
      %s216 = scalar_select %p215, %s17, 1
      %s217 = smul.addr %s216, 2
      %s218 = scalar_lea.vmem %s5, %s217
      %p219 = scmp.lt.s32.totalorder %s17, 1
      %s220 = scalar_select %p219, %s17, 1
      %s221 = smul.addr %s220, 2
      %s222 = scalar_lea.vmem %s0, %s221
      %p223 = scmp.lt.s32.totalorder %s17, 1
      %s224 = scalar_select %p223, %s17, 1
      %s225 = smul.addr %s224, 2
      %s226 = scalar_lea.vmem %s4, %s225
      %p227 = scmp.lt.s32.totalorder %s17, 1
      %s228 = scalar_select %p227, %s17, 1
      %s229 = smul.addr %s228, 2
      %s230 = scalar_lea.vmem %s5, %s229
      %v232 = vld [vmem:[%s222] sm:$0x3]
      %v233 = vunpack.c.l.bf16 %v232
      %v234 = vld [vmem:[%s1] sm:$0xf]
      %236 = vset.pattern.permute.xlu0 0
      %237 = vperm.xlu0 %236, %v234
      %v238 = vpop.permute.xlu0 %237
      %v240 = vmul.f32 %v233, %v238
      %v241 = vld [vmem:[%s2] sm:$0xf]
      %243 = vset.pattern.permute.xlu0 0
      %244 = vperm.xlu0 %243, %v241
      %v245 = vpop.permute.xlu0 %244
      %v247 = vadd.f32 %v240, %v245
      %v248 = vmax.f32 %v247, 0.0
      %v249 = vpack.c.bf16 %v248, %v248
      %251 = vrot.lane.b32.xlu0 %v249, 1
      %v252 = vpop.permute.xlu0 %251
      %vm253 = vcmask 7168
      %v256 = vsel %vm253, 0, %v252
      %257 = vrot.lane.b32.xlu0 %v249, 127
      %v258 = vpop.permute.xlu0 %257
      %vm259 = vcmask 121856
      %v261 = vsel %vm259, %v258, 0
      %v262 = vld [vmem:[%s3] sm:$0x3]
      %s263 = scalar_lea.vmem %s3, 2
      %v264 = vld [vmem:[%s263] sm:$0x3]
      %vm265 = vcmask 31744
      %v267 = vsel %vm265, %v264, 0
      %vm269 = vcmask 1041408
      %v271 = vsel %vm269, %v249, 0
      %273 = vmatprep.subr.bf16.mxu0 0
      %274 = vmatpush1.bf16.msra.mxu0 %v271
      %275 = vmatprep.subr.bf16.mxu0 0
      %276 = vmatpush1.bf16.msra.mxu0 0
      %277 = vmatprep.subr.bf16.mxu0 0
      %278 = vmatpush1.bf16.msra.mxu0 0
      %279 = vmatprep.subr.bf16.mxu0 0
      %280 = vmatpush1.bf16.msra.mxu0 0
      %281 = vmatprep.subr.bf16.mxu0 0
      %282 = vmatpush1.bf16.msra.mxu0 0
      %283 = vmatprep.subr.bf16.mxu0 0
      %284 = vmatpush1.bf16.msra.mxu0 0
      %285 = vmatprep.subr.bf16.mxu0 0
      %286 = vmatpush1.bf16.msra.mxu0 0
      %287 = vmatprep.subr.bf16.mxu0 0
      %288 = vmatpush1.bf16.msra.mxu0 0
      %289 = vmatprep.subr.bf16.mxu0 0
      %290 = vmatpush1.bf16.msra.mxu0 0
      %291 = vmatprep.subr.bf16.mxu0 0
      %292 = vmatpush1.bf16.msra.mxu0 0
      %293 = vmatprep.subr.bf16.mxu0 0
      %294 = vmatpush1.bf16.msra.mxu0 0
      %295 = vmatprep.subr.bf16.mxu0 0
      %296 = vmatpush1.bf16.msra.mxu0 0
      %297 = vmatprep.subr.bf16.mxu0 0
      %298 = vmatpush1.bf16.msra.mxu0 0
      %299 = vmatprep.subr.bf16.mxu0 0
      %300 = vmatpush1.bf16.msra.mxu0 0
      %301 = vmatprep.subr.bf16.mxu0 0
      %302 = vmatpush1.bf16.msra.mxu0 0
      %303 = vmatprep.subr.bf16.mxu0 0
      %304 = vmatpush1.bf16.msra.mxu0 0
      %305 = vmatprep.mubr.bf16.mxu0 0
      %306 = vmatmul.mubr.bf16.gmra.mrb[0].mxu0 %v267
      %v307 = vpop.f32.mrb[0].mxu0
      %v308 = vadd.f32 0.0, %v307
      %v309 = vpop.f32.mrb[0].mxu0
      %v310 = vpop.f32.mrb[0].mxu0
      %v311 = vpop.f32.mrb[0].mxu0
      %312 = vdwg.mxu0
      %v314 = vsel %vm265, %v262, 0
      %v316 = vsel %vm269, %v256, 0
      %318 = vmatprep.subr.bf16.mxu0 0
      %319 = vmatpush1.bf16.msra.mxu0 %v316
      %320 = vmatprep.subr.bf16.mxu0 0
      %321 = vmatpush1.bf16.msra.mxu0 0
      %322 = vmatprep.subr.bf16.mxu0 0
      %323 = vmatpush1.bf16.msra.mxu0 0
      %324 = vmatprep.subr.bf16.mxu0 0
      %325 = vmatpush1.bf16.msra.mxu0 0
      %326 = vmatprep.subr.bf16.mxu0 0
      %327 = vmatpush1.bf16.msra.mxu0 0
      %328 = vmatprep.subr.bf16.mxu0 0
      %329 = vmatpush1.bf16.msra.mxu0 0
      %330 = vmatprep.subr.bf16.mxu0 0
      %331 = vmatpush1.bf16.msra.mxu0 0
      %332 = vmatprep.subr.bf16.mxu0 0
      %333 = vmatpush1.bf16.msra.mxu0 0
      %334 = vmatprep.subr.bf16.mxu0 0
      %335 = vmatpush1.bf16.msra.mxu0 0
      %336 = vmatprep.subr.bf16.mxu0 0
      %337 = vmatpush1.bf16.msra.mxu0 0
      %338 = vmatprep.subr.bf16.mxu0 0
      %339 = vmatpush1.bf16.msra.mxu0 0
      %340 = vmatprep.subr.bf16.mxu0 0
      %341 = vmatpush1.bf16.msra.mxu0 0
      %342 = vmatprep.subr.bf16.mxu0 0
      %343 = vmatpush1.bf16.msra.mxu0 0
      %344 = vmatprep.subr.bf16.mxu0 0
      %345 = vmatpush1.bf16.msra.mxu0 0
      %346 = vmatprep.subr.bf16.mxu0 0
      %347 = vmatpush1.bf16.msra.mxu0 0
      %348 = vmatprep.subr.bf16.mxu0 0
      %349 = vmatpush1.bf16.msra.mxu0 0
      %350 = vmatprep.mubr.bf16.mxu0 0
      %351 = vmatmul.mubr.bf16.gmra.mrb[0].mxu0 %v314
      %v352 = vpop.f32.mrb[0].mxu0
      %v353 = vadd.f32 %v308, %v352
      %v354 = vpop.f32.mrb[0].mxu0
      %v355 = vpop.f32.mrb[0].mxu0
      %v356 = vpop.f32.mrb[0].mxu0
      %357 = vdwg.mxu0
      %s358 = scalar_lea.vmem %s3, 4
      %v359 = vld [vmem:[%s358] sm:$0x3]
      %v361 = vsel %vm265, %v359, 0
      %v363 = vsel %vm269, %v261, 0
      %365 = vmatprep.subr.bf16.mxu0 0
      %366 = vmatpush1.bf16.msra.mxu0 %v363
      %367 = vmatprep.subr.bf16.mxu0 0
      %368 = vmatpush1.bf16.msra.mxu0 0
      %369 = vmatprep.subr.bf16.mxu0 0
      %370 = vmatpush1.bf16.msra.mxu0 0
      %371 = vmatprep.subr.bf16.mxu0 0
      %372 = vmatpush1.bf16.msra.mxu0 0
      %373 = vmatprep.subr.bf16.mxu0 0
      %374 = vmatpush1.bf16.msra.mxu0 0
      %375 = vmatprep.subr.bf16.mxu0 0
      %376 = vmatpush1.bf16.msra.mxu0 0
      %377 = vmatprep.subr.bf16.mxu0 0
      %378 = vmatpush1.bf16.msra.mxu0 0
      %379 = vmatprep.subr.bf16.mxu0 0
      %380 = vmatpush1.bf16.msra.mxu0 0
      %381 = vmatprep.subr.bf16.mxu0 0
      %382 = vmatpush1.bf16.msra.mxu0 0
      %383 = vmatprep.subr.bf16.mxu0 0
      %384 = vmatpush1.bf16.msra.mxu0 0
      %385 = vmatprep.subr.bf16.mxu0 0
      %386 = vmatpush1.bf16.msra.mxu0 0
      %387 = vmatprep.subr.bf16.mxu0 0
      %388 = vmatpush1.bf16.msra.mxu0 0
      %389 = vmatprep.subr.bf16.mxu0 0
      %390 = vmatpush1.bf16.msra.mxu0 0
      %391 = vmatprep.subr.bf16.mxu0 0
      %392 = vmatpush1.bf16.msra.mxu0 0
      %393 = vmatprep.subr.bf16.mxu0 0
      %394 = vmatpush1.bf16.msra.mxu0 0
      %395 = vmatprep.subr.bf16.mxu0 0
      %396 = vmatpush1.bf16.msra.mxu0 0
      %397 = vmatprep.mubr.bf16.mxu0 0
      %398 = vmatmul.mubr.bf16.gmra.mrb[0].mxu0 %v361
      %v399 = vpop.f32.mrb[0].mxu0
      %v400 = vadd.f32 0.0, %v399
      %v401 = vpop.f32.mrb[0].mxu0
      %v402 = vpop.f32.mrb[0].mxu0
      %v403 = vpop.f32.mrb[0].mxu0
      %404 = vdwg.mxu0
      %v405 = vadd.f32 %v353, %v400
      %vm406 = vcmask 125952
      %v407 = vsel %vm406, %v405, 0.0
      %408 = vadd.xlane.f32.xlu0 %v407
      %v409 = vpop.xlane.xlu0 %408
      %v410 = vmul.f32 %v405, %v405
      %v411 = vsel %vm406, %v410, 0.0
      %412 = vadd.xlane.f32.xlu0 %v411
      %v413 = vpop.xlane.xlu0 %412
      %v414 = vsel %vm253, %v409, %v413
      %415 = vxpose.xlu0.b32.start [1/16] %v414, 128
      %416 = vxpose.xlu0.b32.cont [2/16] 0.0, 128
      %417 = vxpose.xlu0.b32.cont [3/16] 0.0, 128
      %418 = vxpose.xlu0.b32.cont [4/16] 0.0, 128
      %419 = vxpose.xlu0.b32.cont [5/16] 0.0, 128
      %420 = vxpose.xlu0.b32.cont [6/16] 0.0, 128
      %421 = vxpose.xlu0.b32.cont [7/16] 0.0, 128
      %422 = vxpose.xlu0.b32.cont [8/16] 0.0, 128
      %423 = vxpose.xlu0.b32.cont [9/16] 0.0, 128
      %424 = vxpose.xlu0.b32.cont [10/16] 0.0, 128
      %425 = vxpose.xlu0.b32.cont [11/16] 0.0, 128
      %426 = vxpose.xlu0.b32.cont [12/16] 0.0, 128
      %427 = vxpose.xlu0.b32.cont [13/16] 0.0, 128
      %428 = vxpose.xlu0.b32.cont [14/16] 0.0, 128
      %429 = vxpose.xlu0.b32.cont [15/16] 0.0, 128
      %430 = vxpose.xlu0.b32.end [16/16] 0.0, 128
      %v431 = vpop.trf.xlu0
      %v432 = vpop.trf.xlu0
      %v433 = vpop.trf.xlu0
      %v434 = vpop.trf.xlu0
      %v435 = vpop.trf.xlu0
      %v436 = vpop.trf.xlu0
      %v437 = vpop.trf.xlu0
      %v438 = vpop.trf.xlu0
      %v439 = vpop.trf.xlu0
      %v440 = vpop.trf.xlu0
      %v441 = vpop.trf.xlu0
      %v442 = vpop.trf.xlu0
      %v443 = vpop.trf.xlu0
      %v444 = vpop.trf.xlu0
      %v445 = vpop.trf.xlu0
      %v446 = vpop.trf.xlu0
      %vm447 = vcmask 25600
      %448 = vst.msk [vmem:[%s230] sm:$0x3] %vm447, %v431
      %v449 = vpack.c.bf16 %v405, %v405
      %vm450 = vcmask 123904
      %451 = vst.msk [vmem:[%s226] sm:$0x3] %vm450, %v449
      %p452 = scmp.lt.s32.totalorder %s17, 1
      %s453 = scalar_select %p452, %s17, 1
      %s454 = smul.addr %s453, 2
      %s455 = scalar_lea.vmem %s4, %s454
      %p456 = scmp.lt.s32.totalorder %s17, 1
      %s457 = scalar_select %p456, %s17, 1
      %s458 = smul.addr %s457, 2
      %s459 = scalar_lea.vmem %s5, %s458
      // Predicated region
      $region37: #{bottleneck_forward.5} parent=35 // pred_check
        %p460 = pneg %p124
      $region38: #{bottleneck_forward.5} parent=35 // pred_check_branch
        %462 = sbr.rel (%p460) target = $region40
      $region39: #{bottleneck_forward.5} parent=35 // pred_region
        _
      $region40: #{bottleneck_forward.5} parent=35 // pred_fallthru
        _
      // Predicated region
      $region41: #{bottleneck_forward.5} parent=35 // pred_check
        %p463 = pneg %p150
      $region42: #{bottleneck_forward.5} parent=35 // pred_check_branch
        %465 = sbr.rel (%p463) target = $region44
      $region43: #{bottleneck_forward.5} parent=35 // pred_region
        _
      $region44: #{bottleneck_forward.5} parent=35 // pred_fallthru
        _
    $region36: #{bottleneck_forward.5} parent=5 // pred_fallthru
      _
    %p466 = scmp.le.s32.totalorder 2, %s12
    // Predicated region
    $region45: #{bottleneck_forward.5} parent=5 // pred_check
      %p467 = pneg %p466
    $region46: #{bottleneck_forward.5} parent=5 // pred_check_branch
      %469 = sbr.rel (%p467) target = $region48
    $region47: #{bottleneck_forward.5} parent=5 // pred_region
      %s470 = ssub.s32 %s12, 2
      // Predicated region
      $region49: #{bottleneck_forward.5} parent=47 // pred_check
        %p471 = pneg %p130
      $region50: #{bottleneck_forward.5} parent=47 // pred_check_branch
        %473 = sbr.rel (%p471) target = $region52
      $region51: #{bottleneck_forward.5} parent=47 // pred_region
        %p474 = scmp.lt.s32.totalorder %s18, 1
        %s475 = scalar_select %p474, %s18, 1
        %s476 = smul.addr %s475, 2
        %s477 = scalar_lea.vmem %s4, %s476
      $region52: #{bottleneck_forward.5} parent=47 // pred_fallthru
        _
      // Predicated region
      $region53: #{bottleneck_forward.5} parent=47 // pred_check
        %p478 = pneg %p156
      $region54: #{bottleneck_forward.5} parent=47 // pred_check_branch
        %480 = sbr.rel (%p478) target = $region56
      $region55: #{bottleneck_forward.5} parent=47 // pred_region
        %p481 = scmp.lt.s32.totalorder %s18, 1
        %s482 = scalar_select %p481, %s18, 1
        %s483 = smul.addr %s482, 2
        %s484 = scalar_lea.vmem %s5, %s483
      $region56: #{bottleneck_forward.5} parent=47 // pred_fallthru
        _
    $region48: #{bottleneck_forward.5} parent=5 // pred_fallthru
      _
  $region6: #{bottleneck_forward.5} parent=0 // loop_footer
    %s16 = sadd.s32 1, %s12
  $region7: #{bottleneck_forward.5} parent=0 // loop_footer_branch
    %11 = sbr.rel target = $region3
  $region8: #{bottleneck_forward.5} parent=0 // loop_exit
    _

</llo_original>
